<compile_context>
chip_gen: v7x
topology: tpu7x:2x2x1
jax: 0.10.0
libtpu: 0.0.40
codegen_flags: <defaults>
</compile_context>

<pallas_src>
import jax
import jax.numpy as jnp
from jax.experimental import pallas as pl
from jax.experimental.pallas import tpu as pltpu


def relu_conv1x1_kernel(x_ref, w_ref, o_ref):
    # x_ref: (Cin, HW_pad) f32  -- lane dim padded to a multiple of 128; the
    #        out-of-bounds tail lanes hold unspecified values (discarded below).
    # w_ref: (Cout, Cin) bf16
    # o_ref: (Cout, HW_pad) f32 -- only the valid HW columns are written back.
    x = jnp.maximum(x_ref[...], 0.0).astype(jnp.bfloat16)   # ReLU in f32 (VPU), bf16 for MXU
    o_ref[...] = jnp.dot(
        w_ref[...], x, preferred_element_type=jnp.float32    # bf16 MXU, f32 accumulate
    ).astype(o_ref.dtype)


def relu_conv1x1(x_nchw, w_oihw):
    """Equivalent of Conv2d(Cin, Cout, 1, bias=False)(ReLU()(x)) on NCHW input (N==1)."""
    N, Cin, H, W = x_nchw.shape
    Cout = w_oihw.shape[0]
    assert w_oihw.shape == (Cout, Cin, 1, 1)
    assert N == 1, "NCHW-native fast path assumes N == 1 (add a batch grid axis for N > 1)"

    HW = H * W
    HW_pad = pl.cdiv(HW, 128) * 128          # 196 -> 256: lane-dense block width

    # Free reshapes (contiguous for N == 1); weight cast done once in the wrapper.
    x2d = x_nchw.reshape(Cin, HW)                                # (Cin, HW)  f32
    w2d = w_oihw.reshape(Cout, Cin).astype(jnp.bfloat16)         # (Cout, Cin) bf16

    out2d = pl.pallas_call(
        relu_conv1x1_kernel,
        out_shape=jax.ShapeDtypeStruct((Cout, HW), jnp.float32),
        grid=(1,),                            # single step: no per-step overhead, no re-DMA
        in_specs=[
            pl.BlockSpec((Cin, HW_pad), lambda i: (0, 0)),       # ragged lane tail masked by Pallas
            pl.BlockSpec((Cout, Cin), lambda i: (0, 0)),
        ],
        out_specs=pl.BlockSpec((Cout, HW_pad), lambda i: (0, 0)),
        compiler_params=pltpu.CompilerParams(
            dimension_semantics=("arbitrary",),
        ),
        cost_estimate=pl.CostEstimate(
            flops=2 * HW * Cin * Cout,
            transcendentals=0,
            bytes_accessed=Cin * HW * 4 + Cout * Cin * 2 + Cout * HW * 4,
        ),
    )(x2d, w2d)

    # Free reshape back to NCHW.
    return out2d.reshape(N, Cout, H, W)


if __name__ == "__main__":
    key = jax.random.PRNGKey(0)
    kx, kw = jax.random.split(key)

    # Shapes implied by the module: x99 ~ (1, 1024, 14, 14), conv 1024 -> 256, 1x1
    N, Cin, H, W = 1, 1024, 14, 14
    Cout = 256

    x = jax.random.normal(kx, (N, Cin, H, W), dtype=jnp.float32)
    # Deterministic synthetic weights (not a checkpoint load)
    w = jax.random.normal(kw, (Cout, Cin, 1, 1), dtype=jnp.float32) * 0.02

    out = relu_conv1x1(x, w)
    out = jax.block_until_ready(out)
    assert out.shape == (N, Cout, H, W), out.shape

    # Reference 1: same bf16 quantization as the kernel, f32 accumulate (tight check)
    x_q = jnp.maximum(x[0], 0.0).astype(jnp.bfloat16).astype(jnp.float32)      # (Cin, H, W)
    w_q = w.reshape(Cout, Cin).astype(jnp.bfloat16).astype(jnp.float32)        # (Cout, Cin)
    ref_q = jnp.einsum("chw,oc->ohw", x_q, w_q)[None]
    assert jnp.allclose(out, ref_q, atol=2e-3, rtol=2e-3)

    # Reference 2: full-f32 PyTorch-equivalent semantics (loose check, bf16 weight quantization)
    ref_f32 = jnp.einsum("nchw,oc->nohw", jnp.maximum(x, 0.0), w[:, :, 0, 0])
    assert jnp.allclose(out, ref_f32, atol=2e-2, rtol=2e-2)

    print("KERNEL_OK")
</pallas_src>

<mosaic_0001>
module attributes {stable_mosaic.version = 11 : i64} {
  func.func @relu_conv1x1_kernel(%arg0: i32, %arg1: memref<1024x256xf32, #tpu.memory_space<vmem>>, %arg2: memref<256x1024xbf16, #tpu.memory_space<vmem>>, %arg3: memref<256x256xf32, #tpu.memory_space<vmem>>) attributes {dimension_semantics = [#tpu.dimension_semantics<arbitrary>], iteration_bounds = array<i64: 1>, scalar_prefetch = 0 : i64, scratch_operands = 0 : i64, tpu.core_type = #tpu.core_type<tc>, window_params = [{transform_indices = @transform_0, window_bounds = array<i64: 1024, 256>}, {pipeline_mode = #tpu.pipeline_mode<synchronous>, transform_indices = @transform_1, window_bounds = array<i64: 256, 1024>}, {transform_indices = @transform_2, window_bounds = array<i64: 256, 256>}]} {
    %c0 = arith.constant 0 : index
    %c0_0 = arith.constant 0 : index
    %0 = vector.load %arg1[%c0, %c0_0] : memref<1024x256xf32, #tpu.memory_space<vmem>>, vector<1024x256xf32>
    %cst = arith.constant 0.000000e+00 : f32
    %1 = vector.broadcast %cst : f32 to vector<1024x256xf32>
    %2 = arith.maximumf %0, %1 : vector<1024x256xf32>
    %3 = arith.truncf %2 : vector<1024x256xf32> to vector<1024x256xbf16>
    %c0_1 = arith.constant 0 : index
    %c0_2 = arith.constant 0 : index
    %4 = vector.load %arg2[%c0_1, %c0_2] : memref<256x1024xbf16, #tpu.memory_space<vmem>>, vector<256x1024xbf16>
    %cst_3 = arith.constant dense<0.000000e+00> : vector<256x256xf32>
    %5 = tpu.matmul %4, %3, %cst_3 {dimension_numbers = #tpu.dot_dimension_numbers<[1], [0], [0], [1], [0, 0, 1, 1], [], []>} : vector<256x1024xbf16>, vector<1024x256xbf16>, vector<256x256xf32> -> vector<256x256xf32>
    %c0_4 = arith.constant 0 : index
    %c0_5 = arith.constant 0 : index
    %6 = vector.load %arg3[%c0_4, %c0_5] : memref<256x256xf32, #tpu.memory_space<vmem>>, vector<256x256xf32>
    tpu.vector_store %arg3[%c0_4, %c0_5], %5 {strides = array<i32>} : memref<256x256xf32, #tpu.memory_space<vmem>>, vector<256x256xf32>,
    return
  }
  func.func @transform_0(%arg0: i32) -> (i32, i32) {
    %c0_i32 = arith.constant 0 : i32
    %c0_i32_0 = arith.constant 0 : i32
    %c0_i32_1 = arith.constant 0 : i32
    return %c0_i32, %c0_i32_0 : i32, i32
  }
  func.func @transform_1(%arg0: i32) -> (i32, i32) {
    %c0_i32 = arith.constant 0 : i32
    %c0_i32_0 = arith.constant 0 : i32
    %c0_i32_1 = arith.constant 0 : i32
    return %c0_i32, %c0_i32_0 : i32, i32
  }
  func.func @transform_2(%arg0: i32) -> (i32, i32) {
    %c0_i32 = arith.constant 0 : i32
    %c0_i32_0 = arith.constant 0 : i32
    %c0_i32_1 = arith.constant 0 : i32
    return %c0_i32, %c0_i32_0 : i32, i32
  }
}

</mosaic_0001>

<llo_original>
// kernel: tpu_custom_call.1
$region0: #{tpu_custom_call.1}
  #allocation0 [shape = 'u32[]', space=smem, size = 0x4, offset = 0x4, fixed_abs, tag = 'smem constant byte address 0x4 - core index']
  #allocation1 [shape = 'u32[144,128]{1,0:T(1,128)}', space=vmem, size = 0x12000, scoped, tag = 'internal scratch']
  %s0 = inlined_call_operand.vmem [shape: f32[1024,196], index: 0, kind: input, shape index: {}]
  %s1 = inlined_call_operand.vmem [shape: bf16[256,1024], index: 1, kind: input, shape index: {}]
  %s2 = inlined_call_operand.vmem [shape: f32[256,196], index: 2, kind: output, shape index: {}]
  %s3 = sld [smem:[#allocation0]]
  $region18: #{tpu_custom_call.1} parent=0
    _
  %s5 = ssub.s32 1, %s3
  %s6 = scalar_select 0, %s5, %s3
  // Predicated region
  $region2: #{tpu_custom_call.1} parent=0 // pred_check
    _
  $region3: #{tpu_custom_call.1} parent=0 // pred_check_branch
    %8 = sbr.rel (0) target = $region5
  $region4: #{tpu_custom_call.1} parent=0 // pred_region
    _
  $region5: #{tpu_custom_call.1} parent=0 // pred_fallthru
    _
  // Predicated region
  $region6: #{tpu_custom_call.1} parent=0 // pred_check
    _
  $region7: #{tpu_custom_call.1} parent=0 // pred_check_branch
    %10 = sbr.rel (0) target = $region9
  $region8: #{tpu_custom_call.1} parent=0 // pred_region
    _
  $region9: #{tpu_custom_call.1} parent=0 // pred_fallthru
    _
  %v11 = vld [vmem:[%s0] sm:$0xff]
  %v12 = vld [vmem:[%s0 + $0x8] sm:$0xff]
  %v13 = vld [vmem:[%s0 + $0x10] sm:$0xff]
  %v14 = vld [vmem:[%s0 + $0x18] sm:$0xff]
  %v15 = vld [vmem:[%s0 + $0x20] sm:$0xff]
  %v16 = vld [vmem:[%s0 + $0x28] sm:$0xff]
  %v17 = vld [vmem:[%s0 + $0x30] sm:$0xff]
  %v18 = vld [vmem:[%s0 + $0x38] sm:$0xff]
  %v19 = vld [vmem:[%s0 + $0x40] sm:$0xff]
  %v20 = vld [vmem:[%s0 + $0x48] sm:$0xff]
  %v21 = vld [vmem:[%s0 + $0x50] sm:$0xff]
  %v22 = vld [vmem:[%s0 + $0x58] sm:$0xff]
  %v23 = vld [vmem:[%s0 + $0x60] sm:$0xff]
  %v24 = vld [vmem:[%s0 + $0x68] sm:$0xff]
  %v25 = vld [vmem:[%s0 + $0x70] sm:$0xff]
  %v26 = vld [vmem:[%s0 + $0x78] sm:$0xff]
  %v27 = vld [vmem:[%s0 + $0x80] sm:$0xff]
  %v28 = vld [vmem:[%s0 + $0x88] sm:$0xff]
  %v29 = vld [vmem:[%s0 + $0x90] sm:$0xff]
  %v30 = vld [vmem:[%s0 + $0x98] sm:$0xff]
  %v31 = vld [vmem:[%s0 + $0xa0] sm:$0xff]
  %v32 = vld [vmem:[%s0 + $0xa8] sm:$0xff]
  %v33 = vld [vmem:[%s0 + $0xb0] sm:$0xff]
  %v34 = vld [vmem:[%s0 + $0xb8] sm:$0xff]
  %v35 = vld [vmem:[%s0 + $0xc0] sm:$0xff]
  %v36 = vld [vmem:[%s0 + $0xc8] sm:$0xff]
  %v37 = vld [vmem:[%s0 + $0xd0] sm:$0xff]
  %v38 = vld [vmem:[%s0 + $0xd8] sm:$0xff]
  %v39 = vld [vmem:[%s0 + $0xe0] sm:$0xff]
  %v40 = vld [vmem:[%s0 + $0xe8] sm:$0xff]
  %v41 = vld [vmem:[%s0 + $0xf0] sm:$0xff]
  %v42 = vld [vmem:[%s0 + $0xf8] sm:$0xff]
  %v43 = vld [vmem:[%s0 + $0x100] sm:$0xff]
  %v44 = vld [vmem:[%s0 + $0x108] sm:$0xff]
  %v45 = vld [vmem:[%s0 + $0x110] sm:$0xff]
  %v46 = vld [vmem:[%s0 + $0x118] sm:$0xff]
  %v47 = vld [vmem:[%s0 + $0x120] sm:$0xff]
  %v48 = vld [vmem:[%s0 + $0x128] sm:$0xff]
  %v49 = vld [vmem:[%s0 + $0x130] sm:$0xff]
  %v50 = vld [vmem:[%s0 + $0x138] sm:$0xff]
  %v51 = vld [vmem:[%s0 + $0x140] sm:$0xff]
  %v52 = vld [vmem:[%s0 + $0x148] sm:$0xff]
  %v53 = vld [vmem:[%s0 + $0x150] sm:$0xff]
  %v54 = vld [vmem:[%s0 + $0x158] sm:$0xff]
  %v55 = vld [vmem:[%s0 + $0x160] sm:$0xff]
  %v56 = vld [vmem:[%s0 + $0x168] sm:$0xff]
  %v57 = vld [vmem:[%s0 + $0x170] sm:$0xff]
  %v58 = vld [vmem:[%s0 + $0x178] sm:$0xff]
  %v59 = vld [vmem:[%s0 + $0x180] sm:$0xff]
  %v60 = vld [vmem:[%s0 + $0x188] sm:$0xff]
  %v61 = vld [vmem:[%s0 + $0x190] sm:$0xff]
  %v62 = vld [vmem:[%s0 + $0x198] sm:$0xff]
  %v63 = vld [vmem:[%s0 + $0x1a0] sm:$0xff]
  %v64 = vld [vmem:[%s0 + $0x1a8] sm:$0xff]
  %v65 = vld [vmem:[%s0 + $0x1b0] sm:$0xff]
  %v66 = vld [vmem:[%s0 + $0x1b8] sm:$0xff]
  %v67 = vld [vmem:[%s0 + $0x1c0] sm:$0xff]
  %v68 = vld [vmem:[%s0 + $0x1c8] sm:$0xff]
  %v69 = vld [vmem:[%s0 + $0x1d0] sm:$0xff]
  %v70 = vld [vmem:[%s0 + $0x1d8] sm:$0xff]
  %v71 = vld [vmem:[%s0 + $0x1e0] sm:$0xff]
  %v72 = vld [vmem:[%s0 + $0x1e8] sm:$0xff]
  %v73 = vld [vmem:[%s0 + $0x1f0] sm:$0xff]
  %v74 = vld [vmem:[%s0 + $0x1f8] sm:$0xff]
  %v75 = vld [vmem:[%s0 + $0x200] sm:$0xff]
  %v76 = vld [vmem:[%s0 + $0x208] sm:$0xff]
  %v77 = vld [vmem:[%s0 + $0x210] sm:$0xff]
  %v78 = vld [vmem:[%s0 + $0x218] sm:$0xff]
  %v79 = vld [vmem:[%s0 + $0x220] sm:$0xff]
  %v80 = vld [vmem:[%s0 + $0x228] sm:$0xff]
  %v81 = vld [vmem:[%s0 + $0x230] sm:$0xff]
  %v82 = vld [vmem:[%s0 + $0x238] sm:$0xff]
  %v83 = vld [vmem:[%s0 + $0x240] sm:$0xff]
  %v84 = vld [vmem:[%s0 + $0x248] sm:$0xff]
  %v85 = vld [vmem:[%s0 + $0x250] sm:$0xff]
  %v86 = vld [vmem:[%s0 + $0x258] sm:$0xff]
  %v87 = vld [vmem:[%s0 + $0x260] sm:$0xff]
  %v88 = vld [vmem:[%s0 + $0x268] sm:$0xff]
  %v89 = vld [vmem:[%s0 + $0x270] sm:$0xff]
  %v90 = vld [vmem:[%s0 + $0x278] sm:$0xff]
  %v91 = vld [vmem:[%s0 + $0x280] sm:$0xff]
  %v92 = vld [vmem:[%s0 + $0x288] sm:$0xff]
  %v93 = vld [vmem:[%s0 + $0x290] sm:$0xff]
  %v94 = vld [vmem:[%s0 + $0x298] sm:$0xff]
  %v95 = vld [vmem:[%s0 + $0x2a0] sm:$0xff]
  %v96 = vld [vmem:[%s0 + $0x2a8] sm:$0xff]
  %v97 = vld [vmem:[%s0 + $0x2b0] sm:$0xff]
  %v98 = vld [vmem:[%s0 + $0x2b8] sm:$0xff]
  %v99 = vld [vmem:[%s0 + $0x2c0] sm:$0xff]
  %v100 = vld [vmem:[%s0 + $0x2c8] sm:$0xff]
  %v101 = vld [vmem:[%s0 + $0x2d0] sm:$0xff]
  %v102 = vld [vmem:[%s0 + $0x2d8] sm:$0xff]
  %v103 = vld [vmem:[%s0 + $0x2e0] sm:$0xff]
  %v104 = vld [vmem:[%s0 + $0x2e8] sm:$0xff]
  %v105 = vld [vmem:[%s0 + $0x2f0] sm:$0xff]
  %v106 = vld [vmem:[%s0 + $0x2f8] sm:$0xff]
  %v107 = vld [vmem:[%s0 + $0x300] sm:$0xff]
  %v108 = vld [vmem:[%s0 + $0x308] sm:$0xff]
  %v109 = vld [vmem:[%s0 + $0x310] sm:$0xff]
  %v110 = vld [vmem:[%s0 + $0x318] sm:$0xff]
  %v111 = vld [vmem:[%s0 + $0x320] sm:$0xff]
  %v112 = vld [vmem:[%s0 + $0x328] sm:$0xff]
  %v113 = vld [vmem:[%s0 + $0x330] sm:$0xff]
  %v114 = vld [vmem:[%s0 + $0x338] sm:$0xff]
  %v115 = vld [vmem:[%s0 + $0x340] sm:$0xff]
  %v116 = vld [vmem:[%s0 + $0x348] sm:$0xff]
  %v117 = vld [vmem:[%s0 + $0x350] sm:$0xff]
  %v118 = vld [vmem:[%s0 + $0x358] sm:$0xff]
  %v119 = vld [vmem:[%s0 + $0x360] sm:$0xff]
  %v120 = vld [vmem:[%s0 + $0x368] sm:$0xff]
  %v121 = vld [vmem:[%s0 + $0x370] sm:$0xff]
  %v122 = vld [vmem:[%s0 + $0x378] sm:$0xff]
  %v123 = vld [vmem:[%s0 + $0x380] sm:$0xff]
  %v124 = vld [vmem:[%s0 + $0x388] sm:$0xff]
  %v125 = vld [vmem:[%s0 + $0x390] sm:$0xff]
  %v126 = vld [vmem:[%s0 + $0x398] sm:$0xff]
  %v127 = vld [vmem:[%s0 + $0x3a0] sm:$0xff]
  %v128 = vld [vmem:[%s0 + $0x3a8] sm:$0xff]
  %v129 = vld [vmem:[%s0 + $0x3b0] sm:$0xff]
  %v130 = vld [vmem:[%s0 + $0x3b8] sm:$0xff]
  %v131 = vld [vmem:[%s0 + $0x3c0] sm:$0xff]
  %v132 = vld [vmem:[%s0 + $0x3c8] sm:$0xff]
  %v133 = vld [vmem:[%s0 + $0x3d0] sm:$0xff]
  %v134 = vld [vmem:[%s0 + $0x3d8] sm:$0xff]
  %v135 = vld [vmem:[%s0 + $0x3e0] sm:$0xff]
  %v136 = vld [vmem:[%s0 + $0x3e8] sm:$0xff]
  %v137 = vld [vmem:[%s0 + $0x3f0] sm:$0xff]
  %v138 = vld [vmem:[%s0 + $0x3f8] sm:$0xff]
  %v139 = vld [vmem:[%s0 + $0x400] sm:$0xff]
  %v140 = vld [vmem:[%s0 + $0x408] sm:$0xff]
  %v141 = vld [vmem:[%s0 + $0x410] sm:$0xff]
  %v142 = vld [vmem:[%s0 + $0x418] sm:$0xff]
  %v143 = vld [vmem:[%s0 + $0x420] sm:$0xff]
  %v144 = vld [vmem:[%s0 + $0x428] sm:$0xff]
  %v145 = vld [vmem:[%s0 + $0x430] sm:$0xff]
  %v146 = vld [vmem:[%s0 + $0x438] sm:$0xff]
  %v147 = vld [vmem:[%s0 + $0x440] sm:$0xff]
  %v148 = vld [vmem:[%s0 + $0x448] sm:$0xff]
  %v149 = vld [vmem:[%s0 + $0x450] sm:$0xff]
  %v150 = vld [vmem:[%s0 + $0x458] sm:$0xff]
  %v151 = vld [vmem:[%s0 + $0x460] sm:$0xff]
  %v152 = vld [vmem:[%s0 + $0x468] sm:$0xff]
  %v153 = vld [vmem:[%s0 + $0x470] sm:$0xff]
  %v154 = vld [vmem:[%s0 + $0x478] sm:$0xff]
  %v155 = vld [vmem:[%s0 + $0x480] sm:$0xff]
  %v156 = vld [vmem:[%s0 + $0x488] sm:$0xff]
  %v157 = vld [vmem:[%s0 + $0x490] sm:$0xff]
  %v158 = vld [vmem:[%s0 + $0x498] sm:$0xff]
  %v159 = vld [vmem:[%s0 + $0x4a0] sm:$0xff]
  %v160 = vld [vmem:[%s0 + $0x4a8] sm:$0xff]
  %v161 = vld [vmem:[%s0 + $0x4b0] sm:$0xff]
  %v162 = vld [vmem:[%s0 + $0x4b8] sm:$0xff]
  %v163 = vld [vmem:[%s0 + $0x4c0] sm:$0xff]
  %v164 = vld [vmem:[%s0 + $0x4c8] sm:$0xff]
  %v165 = vld [vmem:[%s0 + $0x4d0] sm:$0xff]
  %v166 = vld [vmem:[%s0 + $0x4d8] sm:$0xff]
  %v167 = vld [vmem:[%s0 + $0x4e0] sm:$0xff]
  %v168 = vld [vmem:[%s0 + $0x4e8] sm:$0xff]
  %v169 = vld [vmem:[%s0 + $0x4f0] sm:$0xff]
  %v170 = vld [vmem:[%s0 + $0x4f8] sm:$0xff]
  %v171 = vld [vmem:[%s0 + $0x500] sm:$0xff]
  %v172 = vld [vmem:[%s0 + $0x508] sm:$0xff]
  %v173 = vld [vmem:[%s0 + $0x510] sm:$0xff]
  %v174 = vld [vmem:[%s0 + $0x518] sm:$0xff]
  %v175 = vld [vmem:[%s0 + $0x520] sm:$0xff]
  %v176 = vld [vmem:[%s0 + $0x528] sm:$0xff]
  %v177 = vld [vmem:[%s0 + $0x530] sm:$0xff]
  %v178 = vld [vmem:[%s0 + $0x538] sm:$0xff]
  %v179 = vld [vmem:[%s0 + $0x540] sm:$0xff]
  %v180 = vld [vmem:[%s0 + $0x548] sm:$0xff]
  %v181 = vld [vmem:[%s0 + $0x550] sm:$0xff]
  %v182 = vld [vmem:[%s0 + $0x558] sm:$0xff]
  %v183 = vld [vmem:[%s0 + $0x560] sm:$0xff]
  %v184 = vld [vmem:[%s0 + $0x568] sm:$0xff]
  %v185 = vld [vmem:[%s0 + $0x570] sm:$0xff]
  %v186 = vld [vmem:[%s0 + $0x578] sm:$0xff]
  %v187 = vld [vmem:[%s0 + $0x580] sm:$0xff]
  %v188 = vld [vmem:[%s0 + $0x588] sm:$0xff]
  %v189 = vld [vmem:[%s0 + $0x590] sm:$0xff]
  %v190 = vld [vmem:[%s0 + $0x598] sm:$0xff]
  %v191 = vld [vmem:[%s0 + $0x5a0] sm:$0xff]
  %v192 = vld [vmem:[%s0 + $0x5a8] sm:$0xff]
  %v193 = vld [vmem:[%s0 + $0x5b0] sm:$0xff]
  %v194 = vld [vmem:[%s0 + $0x5b8] sm:$0xff]
  %v195 = vld [vmem:[%s0 + $0x5c0] sm:$0xff]
  %v196 = vld [vmem:[%s0 + $0x5c8] sm:$0xff]
  %v197 = vld [vmem:[%s0 + $0x5d0] sm:$0xff]
  %v198 = vld [vmem:[%s0 + $0x5d8] sm:$0xff]
  %v199 = vld [vmem:[%s0 + $0x5e0] sm:$0xff]
  %v200 = vld [vmem:[%s0 + $0x5e8] sm:$0xff]
  %v201 = vld [vmem:[%s0 + $0x5f0] sm:$0xff]
  %v202 = vld [vmem:[%s0 + $0x5f8] sm:$0xff]
  %v203 = vld [vmem:[%s0 + $0x600] sm:$0xff]
  %v204 = vld [vmem:[%s0 + $0x608] sm:$0xff]
  %v205 = vld [vmem:[%s0 + $0x610] sm:$0xff]
  %v206 = vld [vmem:[%s0 + $0x618] sm:$0xff]
  %v207 = vld [vmem:[%s0 + $0x620] sm:$0xff]
  %v208 = vld [vmem:[%s0 + $0x628] sm:$0xff]
  %v209 = vld [vmem:[%s0 + $0x630] sm:$0xff]
  %v210 = vld [vmem:[%s0 + $0x638] sm:$0xff]
  %v211 = vld [vmem:[%s0 + $0x640] sm:$0xff]
  %v212 = vld [vmem:[%s0 + $0x648] sm:$0xff]
  %v213 = vld [vmem:[%s0 + $0x650] sm:$0xff]
  %v214 = vld [vmem:[%s0 + $0x658] sm:$0xff]
  %v215 = vld [vmem:[%s0 + $0x660] sm:$0xff]
  %v216 = vld [vmem:[%s0 + $0x668] sm:$0xff]
  %v217 = vld [vmem:[%s0 + $0x670] sm:$0xff]
  %v218 = vld [vmem:[%s0 + $0x678] sm:$0xff]
  %v219 = vld [vmem:[%s0 + $0x680] sm:$0xff]
  %v220 = vld [vmem:[%s0 + $0x688] sm:$0xff]
  %v221 = vld [vmem:[%s0 + $0x690] sm:$0xff]
  %v222 = vld [vmem:[%s0 + $0x698] sm:$0xff]
  %v223 = vld [vmem:[%s0 + $0x6a0] sm:$0xff]
  %v224 = vld [vmem:[%s0 + $0x6a8] sm:$0xff]
  %v225 = vld [vmem:[%s0 + $0x6b0] sm:$0xff]
  %v226 = vld [vmem:[%s0 + $0x6b8] sm:$0xff]
  %v227 = vld [vmem:[%s0 + $0x6c0] sm:$0xff]
  %v228 = vld [vmem:[%s0 + $0x6c8] sm:$0xff]
  %v229 = vld [vmem:[%s0 + $0x6d0] sm:$0xff]
  %v230 = vld [vmem:[%s0 + $0x6d8] sm:$0xff]
  %v231 = vld [vmem:[%s0 + $0x6e0] sm:$0xff]
  %v232 = vld [vmem:[%s0 + $0x6e8] sm:$0xff]
  %v233 = vld [vmem:[%s0 + $0x6f0] sm:$0xff]
  %v234 = vld [vmem:[%s0 + $0x6f8] sm:$0xff]
  %v235 = vld [vmem:[%s0 + $0x700] sm:$0xff]
  %v236 = vld [vmem:[%s0 + $0x708] sm:$0xff]
  %v237 = vld [vmem:[%s0 + $0x710] sm:$0xff]
  %v238 = vld [vmem:[%s0 + $0x718] sm:$0xff]
  %v239 = vld [vmem:[%s0 + $0x720] sm:$0xff]
  %v240 = vld [vmem:[%s0 + $0x728] sm:$0xff]
  %v241 = vld [vmem:[%s0 + $0x730] sm:$0xff]
  %v242 = vld [vmem:[%s0 + $0x738] sm:$0xff]
  %v243 = vld [vmem:[%s0 + $0x740] sm:$0xff]
  %v244 = vld [vmem:[%s0 + $0x748] sm:$0xff]
  %v245 = vld [vmem:[%s0 + $0x750] sm:$0xff]
  %v246 = vld [vmem:[%s0 + $0x758] sm:$0xff]
  %v247 = vld [vmem:[%s0 + $0x760] sm:$0xff]
  %v248 = vld [vmem:[%s0 + $0x768] sm:$0xff]
  %v249 = vld [vmem:[%s0 + $0x770] sm:$0xff]
  %v250 = vld [vmem:[%s0 + $0x778] sm:$0xff]
  %v251 = vld [vmem:[%s0 + $0x780] sm:$0xff]
  %v252 = vld [vmem:[%s0 + $0x788] sm:$0xff]
  %v253 = vld [vmem:[%s0 + $0x790] sm:$0xff]
  %v254 = vld [vmem:[%s0 + $0x798] sm:$0xff]
  %v255 = vld [vmem:[%s0 + $0x7a0] sm:$0xff]
  %v256 = vld [vmem:[%s0 + $0x7a8] sm:$0xff]
  %v257 = vld [vmem:[%s0 + $0x7b0] sm:$0xff]
  %v258 = vld [vmem:[%s0 + $0x7b8] sm:$0xff]
  %v259 = vld [vmem:[%s0 + $0x7c0] sm:$0xff]
  %v260 = vld [vmem:[%s0 + $0x7c8] sm:$0xff]
  %v261 = vld [vmem:[%s0 + $0x7d0] sm:$0xff]
  %v262 = vld [vmem:[%s0 + $0x7d8] sm:$0xff]
  %v263 = vld [vmem:[%s0 + $0x7e0] sm:$0xff]
  %v264 = vld [vmem:[%s0 + $0x7e8] sm:$0xff]
  %v265 = vld [vmem:[%s0 + $0x7f0] sm:$0xff]
  %v266 = vld [vmem:[%s0 + $0x7f8] sm:$0xff]
  %v267 = vmax.f32 %v11, 0.0
  %v268 = vmax.f32 %v12, 0.0
  %v269 = vmax.f32 %v13, 0.0
  %v270 = vmax.f32 %v14, 0.0
  %v271 = vmax.f32 %v15, 0.0
  %v272 = vmax.f32 %v16, 0.0
  %v273 = vmax.f32 %v17, 0.0
  %v274 = vmax.f32 %v18, 0.0
  %v275 = vmax.f32 %v19, 0.0
  %v276 = vmax.f32 %v20, 0.0
  %v277 = vmax.f32 %v21, 0.0
  %v278 = vmax.f32 %v22, 0.0
  %v279 = vmax.f32 %v23, 0.0
  %v280 = vmax.f32 %v24, 0.0
  %v281 = vmax.f32 %v25, 0.0
  %v282 = vmax.f32 %v26, 0.0
  %v283 = vmax.f32 %v27, 0.0
  %v284 = vmax.f32 %v28, 0.0
  %v285 = vmax.f32 %v29, 0.0
  %v286 = vmax.f32 %v30, 0.0
  %v287 = vmax.f32 %v31, 0.0
  %v288 = vmax.f32 %v32, 0.0
  %v289 = vmax.f32 %v33, 0.0
  %v290 = vmax.f32 %v34, 0.0
  %v291 = vmax.f32 %v35, 0.0
  %v292 = vmax.f32 %v36, 0.0
  %v293 = vmax.f32 %v37, 0.0
  %v294 = vmax.f32 %v38, 0.0
  %v295 = vmax.f32 %v39, 0.0
  %v296 = vmax.f32 %v40, 0.0
  %v297 = vmax.f32 %v41, 0.0
  %v298 = vmax.f32 %v42, 0.0
  %v299 = vmax.f32 %v43, 0.0
  %v300 = vmax.f32 %v44, 0.0
  %v301 = vmax.f32 %v45, 0.0
  %v302 = vmax.f32 %v46, 0.0
  %v303 = vmax.f32 %v47, 0.0
  %v304 = vmax.f32 %v48, 0.0
  %v305 = vmax.f32 %v49, 0.0
  %v306 = vmax.f32 %v50, 0.0
  %v307 = vmax.f32 %v51, 0.0
  %v308 = vmax.f32 %v52, 0.0
  %v309 = vmax.f32 %v53, 0.0
  %v310 = vmax.f32 %v54, 0.0
  %v311 = vmax.f32 %v55, 0.0
  %v312 = vmax.f32 %v56, 0.0
  %v313 = vmax.f32 %v57, 0.0
  %v314 = vmax.f32 %v58, 0.0
  %v315 = vmax.f32 %v59, 0.0
  %v316 = vmax.f32 %v60, 0.0
  %v317 = vmax.f32 %v61, 0.0
  %v318 = vmax.f32 %v62, 0.0
  %v319 = vmax.f32 %v63, 0.0
  %v320 = vmax.f32 %v64, 0.0
  %v321 = vmax.f32 %v65, 0.0
  %v322 = vmax.f32 %v66, 0.0
  %v323 = vmax.f32 %v67, 0.0
  %v324 = vmax.f32 %v68, 0.0
  %v325 = vmax.f32 %v69, 0.0
  %v326 = vmax.f32 %v70, 0.0
  %v327 = vmax.f32 %v71, 0.0
  %v328 = vmax.f32 %v72, 0.0
  %v329 = vmax.f32 %v73, 0.0
  %v330 = vmax.f32 %v74, 0.0
  %v331 = vmax.f32 %v75, 0.0
  %v332 = vmax.f32 %v76, 0.0
  %v333 = vmax.f32 %v77, 0.0
  %v334 = vmax.f32 %v78, 0.0
  %v335 = vmax.f32 %v79, 0.0
  %v336 = vmax.f32 %v80, 0.0
  %v337 = vmax.f32 %v81, 0.0
  %v338 = vmax.f32 %v82, 0.0
  %v339 = vmax.f32 %v83, 0.0
  %v340 = vmax.f32 %v84, 0.0
  %v341 = vmax.f32 %v85, 0.0
  %v342 = vmax.f32 %v86, 0.0
  %v343 = vmax.f32 %v87, 0.0
  %v344 = vmax.f32 %v88, 0.0
  %v345 = vmax.f32 %v89, 0.0
  %v346 = vmax.f32 %v90, 0.0
  %v347 = vmax.f32 %v91, 0.0
  %v348 = vmax.f32 %v92, 0.0
  %v349 = vmax.f32 %v93, 0.0
  %v350 = vmax.f32 %v94, 0.0
  %v351 = vmax.f32 %v95, 0.0
  %v352 = vmax.f32 %v96, 0.0
  %v353 = vmax.f32 %v97, 0.0
  %v354 = vmax.f32 %v98, 0.0
  %v355 = vmax.f32 %v99, 0.0
  %v356 = vmax.f32 %v100, 0.0
  %v357 = vmax.f32 %v101, 0.0
  %v358 = vmax.f32 %v102, 0.0
  %v359 = vmax.f32 %v103, 0.0
  %v360 = vmax.f32 %v104, 0.0
  %v361 = vmax.f32 %v105, 0.0
  %v362 = vmax.f32 %v106, 0.0
  %v363 = vmax.f32 %v107, 0.0
  %v364 = vmax.f32 %v108, 0.0
  %v365 = vmax.f32 %v109, 0.0
  %v366 = vmax.f32 %v110, 0.0
  %v367 = vmax.f32 %v111, 0.0
  %v368 = vmax.f32 %v112, 0.0
  %v369 = vmax.f32 %v113, 0.0
  %v370 = vmax.f32 %v114, 0.0
  %v371 = vmax.f32 %v115, 0.0
  %v372 = vmax.f32 %v116, 0.0
  %v373 = vmax.f32 %v117, 0.0
  %v374 = vmax.f32 %v118, 0.0
  %v375 = vmax.f32 %v119, 0.0
  %v376 = vmax.f32 %v120, 0.0
  %v377 = vmax.f32 %v121, 0.0
  %v378 = vmax.f32 %v122, 0.0
  %v379 = vmax.f32 %v123, 0.0
  %v380 = vmax.f32 %v124, 0.0
  %v381 = vmax.f32 %v125, 0.0
  %v382 = vmax.f32 %v126, 0.0
  %v383 = vmax.f32 %v127, 0.0
  %v384 = vmax.f32 %v128, 0.0
  %v385 = vmax.f32 %v129, 0.0
  %v386 = vmax.f32 %v130, 0.0
  %v387 = vmax.f32 %v131, 0.0
  %v388 = vmax.f32 %v132, 0.0
  %v389 = vmax.f32 %v133, 0.0
  %v390 = vmax.f32 %v134, 0.0
  %v391 = vmax.f32 %v135, 0.0
  %v392 = vmax.f32 %v136, 0.0
  %v393 = vmax.f32 %v137, 0.0
  %v394 = vmax.f32 %v138, 0.0
  %v395 = vmax.f32 %v139, 0.0
  %v396 = vmax.f32 %v140, 0.0
  %v397 = vmax.f32 %v141, 0.0
  %v398 = vmax.f32 %v142, 0.0
  %v399 = vmax.f32 %v143, 0.0
  %v400 = vmax.f32 %v144, 0.0
  %v401 = vmax.f32 %v145, 0.0
  %v402 = vmax.f32 %v146, 0.0
  %v403 = vmax.f32 %v147, 0.0
  %v404 = vmax.f32 %v148, 0.0
  %v405 = vmax.f32 %v149, 0.0
  %v406 = vmax.f32 %v150, 0.0
  %v407 = vmax.f32 %v151, 0.0
  %v408 = vmax.f32 %v152, 0.0
  %v409 = vmax.f32 %v153, 0.0
  %v410 = vmax.f32 %v154, 0.0
  %v411 = vmax.f32 %v155, 0.0
  %v412 = vmax.f32 %v156, 0.0
  %v413 = vmax.f32 %v157, 0.0
  %v414 = vmax.f32 %v158, 0.0
  %v415 = vmax.f32 %v159, 0.0
  %v416 = vmax.f32 %v160, 0.0
  %v417 = vmax.f32 %v161, 0.0
  %v418 = vmax.f32 %v162, 0.0
  %v419 = vmax.f32 %v163, 0.0
  %v420 = vmax.f32 %v164, 0.0
  %v421 = vmax.f32 %v165, 0.0
  %v422 = vmax.f32 %v166, 0.0
  %v423 = vmax.f32 %v167, 0.0
  %v424 = vmax.f32 %v168, 0.0
  %v425 = vmax.f32 %v169, 0.0
  %v426 = vmax.f32 %v170, 0.0
  %v427 = vmax.f32 %v171, 0.0
  %v428 = vmax.f32 %v172, 0.0
  %v429 = vmax.f32 %v173, 0.0
  %v430 = vmax.f32 %v174, 0.0
  %v431 = vmax.f32 %v175, 0.0
  %v432 = vmax.f32 %v176, 0.0
  %v433 = vmax.f32 %v177, 0.0
  %v434 = vmax.f32 %v178, 0.0
  %v435 = vmax.f32 %v179, 0.0
  %v436 = vmax.f32 %v180, 0.0
  %v437 = vmax.f32 %v181, 0.0
  %v438 = vmax.f32 %v182, 0.0
  %v439 = vmax.f32 %v183, 0.0
  %v440 = vmax.f32 %v184, 0.0
  %v441 = vmax.f32 %v185, 0.0
  %v442 = vmax.f32 %v186, 0.0
  %v443 = vmax.f32 %v187, 0.0
  %v444 = vmax.f32 %v188, 0.0
  %v445 = vmax.f32 %v189, 0.0
  %v446 = vmax.f32 %v190, 0.0
  %v447 = vmax.f32 %v191, 0.0
  %v448 = vmax.f32 %v192, 0.0
  %v449 = vmax.f32 %v193, 0.0
  %v450 = vmax.f32 %v194, 0.0
  %v451 = vmax.f32 %v195, 0.0
  %v452 = vmax.f32 %v196, 0.0
  %v453 = vmax.f32 %v197, 0.0
  %v454 = vmax.f32 %v198, 0.0
  %v455 = vmax.f32 %v199, 0.0
  %v456 = vmax.f32 %v200, 0.0
  %v457 = vmax.f32 %v201, 0.0
  %v458 = vmax.f32 %v202, 0.0
  %v459 = vmax.f32 %v203, 0.0
  %v460 = vmax.f32 %v204, 0.0
  %v461 = vmax.f32 %v205, 0.0
  %v462 = vmax.f32 %v206, 0.0
  %v463 = vmax.f32 %v207, 0.0
  %v464 = vmax.f32 %v208, 0.0
  %v465 = vmax.f32 %v209, 0.0
  %v466 = vmax.f32 %v210, 0.0
  %v467 = vmax.f32 %v211, 0.0
  %v468 = vmax.f32 %v212, 0.0
  %v469 = vmax.f32 %v213, 0.0
  %v470 = vmax.f32 %v214, 0.0
  %v471 = vmax.f32 %v215, 0.0
  %v472 = vmax.f32 %v216, 0.0
  %v473 = vmax.f32 %v217, 0.0
  %v474 = vmax.f32 %v218, 0.0
  %v475 = vmax.f32 %v219, 0.0
  %v476 = vmax.f32 %v220, 0.0
  %v477 = vmax.f32 %v221, 0.0
  %v478 = vmax.f32 %v222, 0.0
  %v479 = vmax.f32 %v223, 0.0
  %v480 = vmax.f32 %v224, 0.0
  %v481 = vmax.f32 %v225, 0.0
  %v482 = vmax.f32 %v226, 0.0
  %v483 = vmax.f32 %v227, 0.0
  %v484 = vmax.f32 %v228, 0.0
  %v485 = vmax.f32 %v229, 0.0
  %v486 = vmax.f32 %v230, 0.0
  %v487 = vmax.f32 %v231, 0.0
  %v488 = vmax.f32 %v232, 0.0
  %v489 = vmax.f32 %v233, 0.0
  %v490 = vmax.f32 %v234, 0.0
  %v491 = vmax.f32 %v235, 0.0
  %v492 = vmax.f32 %v236, 0.0
  %v493 = vmax.f32 %v237, 0.0
  %v494 = vmax.f32 %v238, 0.0
  %v495 = vmax.f32 %v239, 0.0
  %v496 = vmax.f32 %v240, 0.0
  %v497 = vmax.f32 %v241, 0.0
  %v498 = vmax.f32 %v242, 0.0
  %v499 = vmax.f32 %v243, 0.0
  %v500 = vmax.f32 %v244, 0.0
  %v501 = vmax.f32 %v245, 0.0
  %v502 = vmax.f32 %v246, 0.0
  %v503 = vmax.f32 %v247, 0.0
  %v504 = vmax.f32 %v248, 0.0
  %v505 = vmax.f32 %v249, 0.0
  %v506 = vmax.f32 %v250, 0.0
  %v507 = vmax.f32 %v251, 0.0
  %v508 = vmax.f32 %v252, 0.0
  %v509 = vmax.f32 %v253, 0.0
  %v510 = vmax.f32 %v254, 0.0
  %v511 = vmax.f32 %v255, 0.0
  %v512 = vmax.f32 %v256, 0.0
  %v513 = vmax.f32 %v257, 0.0
  %v514 = vmax.f32 %v258, 0.0
  %v515 = vmax.f32 %v259, 0.0
  %v516 = vmax.f32 %v260, 0.0
  %v517 = vmax.f32 %v261, 0.0
  %v518 = vmax.f32 %v262, 0.0
  %v519 = vmax.f32 %v263, 0.0
  %v520 = vmax.f32 %v264, 0.0
  %v521 = vmax.f32 %v265, 0.0
  %v522 = vmax.f32 %v266, 0.0
  %v523 = vpack.c.bf16 %v269, %v267
  %v524 = vpack.c.bf16 %v270, %v268
  %v525 = vpack.c.bf16 %v273, %v271
  %v526 = vpack.c.bf16 %v274, %v272
  %v527 = vpack.c.bf16 %v277, %v275
  %v528 = vpack.c.bf16 %v278, %v276
  %v529 = vpack.c.bf16 %v281, %v279
  %v530 = vpack.c.bf16 %v282, %v280
  %v531 = vpack.c.bf16 %v285, %v283
  %v532 = vpack.c.bf16 %v286, %v284
  %v533 = vpack.c.bf16 %v289, %v287
  %v534 = vpack.c.bf16 %v290, %v288
  %v535 = vpack.c.bf16 %v293, %v291
  %v536 = vpack.c.bf16 %v294, %v292
  %v537 = vpack.c.bf16 %v297, %v295
  %v538 = vpack.c.bf16 %v298, %v296
  %v539 = vpack.c.bf16 %v301, %v299
  %v540 = vpack.c.bf16 %v302, %v300
  %v541 = vpack.c.bf16 %v305, %v303
  %v542 = vpack.c.bf16 %v306, %v304
  %v543 = vpack.c.bf16 %v309, %v307
  %v544 = vpack.c.bf16 %v310, %v308
  %v545 = vpack.c.bf16 %v313, %v311
  %v546 = vpack.c.bf16 %v314, %v312
  %v547 = vpack.c.bf16 %v317, %v315
  %v548 = vpack.c.bf16 %v318, %v316
  %v549 = vpack.c.bf16 %v321, %v319
  %v550 = vpack.c.bf16 %v322, %v320
  %v551 = vpack.c.bf16 %v325, %v323
  %v552 = vpack.c.bf16 %v326, %v324
  %v553 = vpack.c.bf16 %v329, %v327
  %v554 = vpack.c.bf16 %v330, %v328
  %v555 = vpack.c.bf16 %v333, %v331
  %v556 = vpack.c.bf16 %v334, %v332
  %v557 = vpack.c.bf16 %v337, %v335
  %v558 = vpack.c.bf16 %v338, %v336
  %v559 = vpack.c.bf16 %v341, %v339
  %v560 = vpack.c.bf16 %v342, %v340
  %v561 = vpack.c.bf16 %v345, %v343
  %v562 = vpack.c.bf16 %v346, %v344
  %v563 = vpack.c.bf16 %v349, %v347
  %v564 = vpack.c.bf16 %v350, %v348
  %v565 = vpack.c.bf16 %v353, %v351
  %v566 = vpack.c.bf16 %v354, %v352
  %v567 = vpack.c.bf16 %v357, %v355
  %v568 = vpack.c.bf16 %v358, %v356
  %v569 = vpack.c.bf16 %v361, %v359
  %v570 = vpack.c.bf16 %v362, %v360
  %v571 = vpack.c.bf16 %v365, %v363
  %v572 = vpack.c.bf16 %v366, %v364
  %v573 = vpack.c.bf16 %v369, %v367
  %v574 = vpack.c.bf16 %v370, %v368
  %v575 = vpack.c.bf16 %v373, %v371
  %v576 = vpack.c.bf16 %v374, %v372
  %v577 = vpack.c.bf16 %v377, %v375
  %v578 = vpack.c.bf16 %v378, %v376
  %v579 = vpack.c.bf16 %v381, %v379
  %v580 = vpack.c.bf16 %v382, %v380
  %v581 = vpack.c.bf16 %v385, %v383
  %v582 = vpack.c.bf16 %v386, %v384
  %v583 = vpack.c.bf16 %v389, %v387
  %v584 = vpack.c.bf16 %v390, %v388
  %v585 = vpack.c.bf16 %v393, %v391
  %v586 = vpack.c.bf16 %v394, %v392
  %v587 = vpack.c.bf16 %v397, %v395
  %v588 = vpack.c.bf16 %v398, %v396
  %v589 = vpack.c.bf16 %v401, %v399
  %v590 = vpack.c.bf16 %v402, %v400
  %v591 = vpack.c.bf16 %v405, %v403
  %v592 = vpack.c.bf16 %v406, %v404
  %v593 = vpack.c.bf16 %v409, %v407
  %v594 = vpack.c.bf16 %v410, %v408
  %v595 = vpack.c.bf16 %v413, %v411
  %v596 = vpack.c.bf16 %v414, %v412
  %v597 = vpack.c.bf16 %v417, %v415
  %v598 = vpack.c.bf16 %v418, %v416
  %v599 = vpack.c.bf16 %v421, %v419
  %v600 = vpack.c.bf16 %v422, %v420
  %v601 = vpack.c.bf16 %v425, %v423
  %v602 = vpack.c.bf16 %v426, %v424
  %v603 = vpack.c.bf16 %v429, %v427
  %v604 = vpack.c.bf16 %v430, %v428
  %v605 = vpack.c.bf16 %v433, %v431
  %v606 = vpack.c.bf16 %v434, %v432
  %v607 = vpack.c.bf16 %v437, %v435
  %v608 = vpack.c.bf16 %v438, %v436
  %v609 = vpack.c.bf16 %v441, %v439
  %v610 = vpack.c.bf16 %v442, %v440
  %v611 = vpack.c.bf16 %v445, %v443
  %v612 = vpack.c.bf16 %v446, %v444
  %v613 = vpack.c.bf16 %v449, %v447
  %v614 = vpack.c.bf16 %v450, %v448
  %v615 = vpack.c.bf16 %v453, %v451
  %v616 = vpack.c.bf16 %v454, %v452
  %v617 = vpack.c.bf16 %v457, %v455
  %v618 = vpack.c.bf16 %v458, %v456
  %v619 = vpack.c.bf16 %v461, %v459
  %v620 = vpack.c.bf16 %v462, %v460
  %v621 = vpack.c.bf16 %v465, %v463
  %v622 = vpack.c.bf16 %v466, %v464
  %v623 = vpack.c.bf16 %v469, %v467
  %v624 = vpack.c.bf16 %v470, %v468
  %v625 = vpack.c.bf16 %v473, %v471
  %v626 = vpack.c.bf16 %v474, %v472
  %v627 = vpack.c.bf16 %v477, %v475
  %v628 = vpack.c.bf16 %v478, %v476
  %v629 = vpack.c.bf16 %v481, %v479
  %v630 = vpack.c.bf16 %v482, %v480
  %v631 = vpack.c.bf16 %v485, %v483
  %v632 = vpack.c.bf16 %v486, %v484
  %v633 = vpack.c.bf16 %v489, %v487
  %v634 = vpack.c.bf16 %v490, %v488
  %v635 = vpack.c.bf16 %v493, %v491
  %v636 = vpack.c.bf16 %v494, %v492
  %v637 = vpack.c.bf16 %v497, %v495
  %v638 = vpack.c.bf16 %v498, %v496
  %v639 = vpack.c.bf16 %v501, %v499
  %v640 = vpack.c.bf16 %v502, %v500
  %v641 = vpack.c.bf16 %v505, %v503
  %v642 = vpack.c.bf16 %v506, %v504
  %v643 = vpack.c.bf16 %v509, %v507
  %v644 = vpack.c.bf16 %v510, %v508
  %v645 = vpack.c.bf16 %v513, %v511
  %v646 = vpack.c.bf16 %v514, %v512
  %v647 = vpack.c.bf16 %v517, %v515
  %v648 = vpack.c.bf16 %v518, %v516
  %v649 = vpack.c.bf16 %v521, %v519
  %v650 = vpack.c.bf16 %v522, %v520
  %v651 = vld [vmem:[%s1] sm:$0xff]
  %v652 = vld [vmem:[%s1 + $0x8] sm:$0xff]
  %v653 = vld [vmem:[%s1 + $0x10] sm:$0xff]
  %v654 = vld [vmem:[%s1 + $0x18] sm:$0xff]
  %v655 = vld [vmem:[%s1 + $0x20] sm:$0xff]
  %v656 = vld [vmem:[%s1 + $0x28] sm:$0xff]
  %v657 = vld [vmem:[%s1 + $0x30] sm:$0xff]
  %v658 = vld [vmem:[%s1 + $0x38] sm:$0xff]
  %v659 = vld [vmem:[%s1 + $0x40] sm:$0xff]
  %v660 = vld [vmem:[%s1 + $0x48] sm:$0xff]
  %v661 = vld [vmem:[%s1 + $0x50] sm:$0xff]
  %v662 = vld [vmem:[%s1 + $0x58] sm:$0xff]
  %v663 = vld [vmem:[%s1 + $0x60] sm:$0xff]
  %v664 = vld [vmem:[%s1 + $0x68] sm:$0xff]
  %v665 = vld [vmem:[%s1 + $0x70] sm:$0xff]
  %v666 = vld [vmem:[%s1 + $0x78] sm:$0xff]
  %v667 = vld [vmem:[%s1 + $0x80] sm:$0xff]
  %v668 = vld [vmem:[%s1 + $0x88] sm:$0xff]
  %v669 = vld [vmem:[%s1 + $0x90] sm:$0xff]
  %v670 = vld [vmem:[%s1 + $0x98] sm:$0xff]
  %v671 = vld [vmem:[%s1 + $0xa0] sm:$0xff]
  %v672 = vld [vmem:[%s1 + $0xa8] sm:$0xff]
  %v673 = vld [vmem:[%s1 + $0xb0] sm:$0xff]
  %v674 = vld [vmem:[%s1 + $0xb8] sm:$0xff]
  %v675 = vld [vmem:[%s1 + $0xc0] sm:$0xff]
  %v676 = vld [vmem:[%s1 + $0xc8] sm:$0xff]
  %v677 = vld [vmem:[%s1 + $0xd0] sm:$0xff]
  %v678 = vld [vmem:[%s1 + $0xd8] sm:$0xff]
  %v679 = vld [vmem:[%s1 + $0xe0] sm:$0xff]
  %v680 = vld [vmem:[%s1 + $0xe8] sm:$0xff]
  %v681 = vld [vmem:[%s1 + $0xf0] sm:$0xff]
  %v682 = vld [vmem:[%s1 + $0xf8] sm:$0xff]
  %v683 = vld [vmem:[%s1 + $0x100] sm:$0xff]
  %v684 = vld [vmem:[%s1 + $0x108] sm:$0xff]
  %v685 = vld [vmem:[%s1 + $0x110] sm:$0xff]
  %v686 = vld [vmem:[%s1 + $0x118] sm:$0xff]
  %v687 = vld [vmem:[%s1 + $0x120] sm:$0xff]
  %v688 = vld [vmem:[%s1 + $0x128] sm:$0xff]
  %v689 = vld [vmem:[%s1 + $0x130] sm:$0xff]
  %v690 = vld [vmem:[%s1 + $0x138] sm:$0xff]
  %v691 = vld [vmem:[%s1 + $0x140] sm:$0xff]
  %v692 = vld [vmem:[%s1 + $0x148] sm:$0xff]
  %v693 = vld [vmem:[%s1 + $0x150] sm:$0xff]
  %v694 = vld [vmem:[%s1 + $0x158] sm:$0xff]
  %v695 = vld [vmem:[%s1 + $0x160] sm:$0xff]
  %v696 = vld [vmem:[%s1 + $0x168] sm:$0xff]
  %v697 = vld [vmem:[%s1 + $0x170] sm:$0xff]
  %v698 = vld [vmem:[%s1 + $0x178] sm:$0xff]
  %v699 = vld [vmem:[%s1 + $0x180] sm:$0xff]
  %v700 = vld [vmem:[%s1 + $0x188] sm:$0xff]
  %v701 = vld [vmem:[%s1 + $0x190] sm:$0xff]
  %v702 = vld [vmem:[%s1 + $0x198] sm:$0xff]
  %v703 = vld [vmem:[%s1 + $0x1a0] sm:$0xff]
  %v704 = vld [vmem:[%s1 + $0x1a8] sm:$0xff]
  %v705 = vld [vmem:[%s1 + $0x1b0] sm:$0xff]
  %v706 = vld [vmem:[%s1 + $0x1b8] sm:$0xff]
  %v707 = vld [vmem:[%s1 + $0x1c0] sm:$0xff]
  %v708 = vld [vmem:[%s1 + $0x1c8] sm:$0xff]
  %v709 = vld [vmem:[%s1 + $0x1d0] sm:$0xff]
  %v710 = vld [vmem:[%s1 + $0x1d8] sm:$0xff]
  %v711 = vld [vmem:[%s1 + $0x1e0] sm:$0xff]
  %v712 = vld [vmem:[%s1 + $0x1e8] sm:$0xff]
  %v713 = vld [vmem:[%s1 + $0x1f0] sm:$0xff]
  %v714 = vld [vmem:[%s1 + $0x1f8] sm:$0xff]
  %v715 = vld [vmem:[%s1 + $0x200] sm:$0xff]
  %v716 = vld [vmem:[%s1 + $0x208] sm:$0xff]
  %v717 = vld [vmem:[%s1 + $0x210] sm:$0xff]
  %v718 = vld [vmem:[%s1 + $0x218] sm:$0xff]
  %v719 = vld [vmem:[%s1 + $0x220] sm:$0xff]
  %v720 = vld [vmem:[%s1 + $0x228] sm:$0xff]
  %v721 = vld [vmem:[%s1 + $0x230] sm:$0xff]
  %v722 = vld [vmem:[%s1 + $0x238] sm:$0xff]
  %v723 = vld [vmem:[%s1 + $0x240] sm:$0xff]
  %v724 = vld [vmem:[%s1 + $0x248] sm:$0xff]
  %v725 = vld [vmem:[%s1 + $0x250] sm:$0xff]
  %v726 = vld [vmem:[%s1 + $0x258] sm:$0xff]
  %v727 = vld [vmem:[%s1 + $0x260] sm:$0xff]
  %v728 = vld [vmem:[%s1 + $0x268] sm:$0xff]
  %v729 = vld [vmem:[%s1 + $0x270] sm:$0xff]
  %v730 = vld [vmem:[%s1 + $0x278] sm:$0xff]
  %v731 = vld [vmem:[%s1 + $0x280] sm:$0xff]
  %v732 = vld [vmem:[%s1 + $0x288] sm:$0xff]
  %v733 = vld [vmem:[%s1 + $0x290] sm:$0xff]
  %v734 = vld [vmem:[%s1 + $0x298] sm:$0xff]
  %v735 = vld [vmem:[%s1 + $0x2a0] sm:$0xff]
  %v736 = vld [vmem:[%s1 + $0x2a8] sm:$0xff]
  %v737 = vld [vmem:[%s1 + $0x2b0] sm:$0xff]
  %v738 = vld [vmem:[%s1 + $0x2b8] sm:$0xff]
  %v739 = vld [vmem:[%s1 + $0x2c0] sm:$0xff]
  %v740 = vld [vmem:[%s1 + $0x2c8] sm:$0xff]
  %v741 = vld [vmem:[%s1 + $0x2d0] sm:$0xff]
  %v742 = vld [vmem:[%s1 + $0x2d8] sm:$0xff]
  %v743 = vld [vmem:[%s1 + $0x2e0] sm:$0xff]
  %v744 = vld [vmem:[%s1 + $0x2e8] sm:$0xff]
  %v745 = vld [vmem:[%s1 + $0x2f0] sm:$0xff]
  %v746 = vld [vmem:[%s1 + $0x2f8] sm:$0xff]
  %v747 = vld [vmem:[%s1 + $0x300] sm:$0xff]
  %v748 = vld [vmem:[%s1 + $0x308] sm:$0xff]
  %v749 = vld [vmem:[%s1 + $0x310] sm:$0xff]
  %v750 = vld [vmem:[%s1 + $0x318] sm:$0xff]
  %v751 = vld [vmem:[%s1 + $0x320] sm:$0xff]
  %v752 = vld [vmem:[%s1 + $0x328] sm:$0xff]
  %v753 = vld [vmem:[%s1 + $0x330] sm:$0xff]
  %v754 = vld [vmem:[%s1 + $0x338] sm:$0xff]
  %v755 = vld [vmem:[%s1 + $0x340] sm:$0xff]
  %v756 = vld [vmem:[%s1 + $0x348] sm:$0xff]
  %v757 = vld [vmem:[%s1 + $0x350] sm:$0xff]
  %v758 = vld [vmem:[%s1 + $0x358] sm:$0xff]
  %v759 = vld [vmem:[%s1 + $0x360] sm:$0xff]
  %v760 = vld [vmem:[%s1 + $0x368] sm:$0xff]
  %v761 = vld [vmem:[%s1 + $0x370] sm:$0xff]
  %v762 = vld [vmem:[%s1 + $0x378] sm:$0xff]
  %v763 = vld [vmem:[%s1 + $0x380] sm:$0xff]
  %v764 = vld [vmem:[%s1 + $0x388] sm:$0xff]
  %v765 = vld [vmem:[%s1 + $0x390] sm:$0xff]
  %v766 = vld [vmem:[%s1 + $0x398] sm:$0xff]
  %v767 = vld [vmem:[%s1 + $0x3a0] sm:$0xff]
  %v768 = vld [vmem:[%s1 + $0x3a8] sm:$0xff]
  %v769 = vld [vmem:[%s1 + $0x3b0] sm:$0xff]
  %v770 = vld [vmem:[%s1 + $0x3b8] sm:$0xff]
  %v771 = vld [vmem:[%s1 + $0x3c0] sm:$0xff]
  %v772 = vld [vmem:[%s1 + $0x3c8] sm:$0xff]
  %v773 = vld [vmem:[%s1 + $0x3d0] sm:$0xff]
  %v774 = vld [vmem:[%s1 + $0x3d8] sm:$0xff]
  %v775 = vld [vmem:[%s1 + $0x3e0] sm:$0xff]
  %v776 = vld [vmem:[%s1 + $0x3e8] sm:$0xff]
  %v777 = vld [vmem:[%s1 + $0x3f0] sm:$0xff]
  %v778 = vld [vmem:[%s1 + $0x3f8] sm:$0xff]
  %v907 = vunpack.c.l.b16 %v651
  %v908 = vunpack.c.h.b16 %v651
  %v909 = vunpack.c.l.b16 %v652
  %v910 = vunpack.c.h.b16 %v652
  %v911 = vunpack.c.l.b16 %v653
  %v912 = vunpack.c.h.b16 %v653
  %v913 = vunpack.c.l.b16 %v654
  %v914 = vunpack.c.h.b16 %v654
  %v915 = vunpack.c.l.b16 %v655
  %v916 = vunpack.c.h.b16 %v655
  %v917 = vunpack.c.l.b16 %v656
  %v918 = vunpack.c.h.b16 %v656
  %v919 = vunpack.c.l.b16 %v657
  %v920 = vunpack.c.h.b16 %v657
  %v921 = vunpack.c.l.b16 %v658
  %v922 = vunpack.c.h.b16 %v658
  %v923 = vunpack.c.l.b16 %v659
  %v924 = vunpack.c.h.b16 %v659
  %v925 = vunpack.c.l.b16 %v660
  %v926 = vunpack.c.h.b16 %v660
  %v927 = vunpack.c.l.b16 %v661
  %v928 = vunpack.c.h.b16 %v661
  %v929 = vunpack.c.l.b16 %v662
  %v930 = vunpack.c.h.b16 %v662
  %v931 = vunpack.c.l.b16 %v663
  %v932 = vunpack.c.h.b16 %v663
  %v933 = vunpack.c.l.b16 %v664
  %v934 = vunpack.c.h.b16 %v664
  %v935 = vunpack.c.l.b16 %v665
  %v936 = vunpack.c.h.b16 %v665
  %v937 = vunpack.c.l.b16 %v666
  %v938 = vunpack.c.h.b16 %v666
  %v939 = vunpack.c.l.b16 %v667
  %v940 = vunpack.c.h.b16 %v667
  %v941 = vunpack.c.l.b16 %v668
  %v942 = vunpack.c.h.b16 %v668
  %v943 = vunpack.c.l.b16 %v669
  %v944 = vunpack.c.h.b16 %v669
  %v945 = vunpack.c.l.b16 %v670
  %v946 = vunpack.c.h.b16 %v670
  %v947 = vunpack.c.l.b16 %v671
  %v948 = vunpack.c.h.b16 %v671
  %v949 = vunpack.c.l.b16 %v672
  %v950 = vunpack.c.h.b16 %v672
  %v951 = vunpack.c.l.b16 %v673
  %v952 = vunpack.c.h.b16 %v673
  %v953 = vunpack.c.l.b16 %v674
  %v954 = vunpack.c.h.b16 %v674
  %v955 = vunpack.c.l.b16 %v675
  %v956 = vunpack.c.h.b16 %v675
  %v957 = vunpack.c.l.b16 %v676
  %v958 = vunpack.c.h.b16 %v676
  %v959 = vunpack.c.l.b16 %v677
  %v960 = vunpack.c.h.b16 %v677
  %v961 = vunpack.c.l.b16 %v678
  %v962 = vunpack.c.h.b16 %v678
  %v963 = vunpack.c.l.b16 %v679
  %v964 = vunpack.c.h.b16 %v679
  %v965 = vunpack.c.l.b16 %v680
  %v966 = vunpack.c.h.b16 %v680
  %v967 = vunpack.c.l.b16 %v681
  %v968 = vunpack.c.h.b16 %v681
  %v969 = vunpack.c.l.b16 %v682
  %v970 = vunpack.c.h.b16 %v682
  %v971 = vunpack.c.l.b16 %v683
  %v972 = vunpack.c.h.b16 %v683
  %v973 = vunpack.c.l.b16 %v684
  %v974 = vunpack.c.h.b16 %v684
  %v975 = vunpack.c.l.b16 %v685
  %v976 = vunpack.c.h.b16 %v685
  %v977 = vunpack.c.l.b16 %v686
  %v978 = vunpack.c.h.b16 %v686
  %v979 = vunpack.c.l.b16 %v687
  %v980 = vunpack.c.h.b16 %v687
  %v981 = vunpack.c.l.b16 %v688
  %v982 = vunpack.c.h.b16 %v688
  %v983 = vunpack.c.l.b16 %v689
  %v984 = vunpack.c.h.b16 %v689
  %v985 = vunpack.c.l.b16 %v690
  %v986 = vunpack.c.h.b16 %v690
  %v987 = vunpack.c.l.b16 %v691
  %v988 = vunpack.c.h.b16 %v691
  %v989 = vunpack.c.l.b16 %v692
  %v990 = vunpack.c.h.b16 %v692
  %v991 = vunpack.c.l.b16 %v693
  %v992 = vunpack.c.h.b16 %v693
  %v993 = vunpack.c.l.b16 %v694
  %v994 = vunpack.c.h.b16 %v694
  %v995 = vunpack.c.l.b16 %v695
  %v996 = vunpack.c.h.b16 %v695
  %v997 = vunpack.c.l.b16 %v696
  %v998 = vunpack.c.h.b16 %v696
  %v999 = vunpack.c.l.b16 %v697
  %v1000 = vunpack.c.h.b16 %v697
  %v1001 = vunpack.c.l.b16 %v698
  %v1002 = vunpack.c.h.b16 %v698
  %v1003 = vunpack.c.l.b16 %v699
  %v1004 = vunpack.c.h.b16 %v699
  %v1005 = vunpack.c.l.b16 %v700
  %v1006 = vunpack.c.h.b16 %v700
  %v1007 = vunpack.c.l.b16 %v701
  %v1008 = vunpack.c.h.b16 %v701
  %v1009 = vunpack.c.l.b16 %v702
  %v1010 = vunpack.c.h.b16 %v702
  %v1011 = vunpack.c.l.b16 %v703
  %v1012 = vunpack.c.h.b16 %v703
  %v1013 = vunpack.c.l.b16 %v704
  %v1014 = vunpack.c.h.b16 %v704
  %v1015 = vunpack.c.l.b16 %v705
  %v1016 = vunpack.c.h.b16 %v705
  %v1017 = vunpack.c.l.b16 %v706
  %v1018 = vunpack.c.h.b16 %v706
  %v1019 = vunpack.c.l.b16 %v707
  %v1020 = vunpack.c.h.b16 %v707
  %v1021 = vunpack.c.l.b16 %v708
  %v1022 = vunpack.c.h.b16 %v708
  %v1023 = vunpack.c.l.b16 %v709
  %v1024 = vunpack.c.h.b16 %v709
  %v1025 = vunpack.c.l.b16 %v710
  %v1026 = vunpack.c.h.b16 %v710
  %v1027 = vunpack.c.l.b16 %v711
  %v1028 = vunpack.c.h.b16 %v711
  %v1029 = vunpack.c.l.b16 %v712
  %v1030 = vunpack.c.h.b16 %v712
  %v1031 = vunpack.c.l.b16 %v713
  %v1032 = vunpack.c.h.b16 %v713
  %v1033 = vunpack.c.l.b16 %v714
  %v1034 = vunpack.c.h.b16 %v714
  %v1035 = vunpack.c.l.b16 %v715
  %v1036 = vunpack.c.h.b16 %v715
  %v1037 = vunpack.c.l.b16 %v716
  %v1038 = vunpack.c.h.b16 %v716
  %v1039 = vunpack.c.l.b16 %v717
  %v1040 = vunpack.c.h.b16 %v717
  %v1041 = vunpack.c.l.b16 %v718
  %v1042 = vunpack.c.h.b16 %v718
  %v1043 = vunpack.c.l.b16 %v719
  %v1044 = vunpack.c.h.b16 %v719
  %v1045 = vunpack.c.l.b16 %v720
  %v1046 = vunpack.c.h.b16 %v720
  %v1047 = vunpack.c.l.b16 %v721
  %v1048 = vunpack.c.h.b16 %v721
  %v1049 = vunpack.c.l.b16 %v722
  %v1050 = vunpack.c.h.b16 %v722
  %v1051 = vunpack.c.l.b16 %v723
  %v1052 = vunpack.c.h.b16 %v723
  %v1053 = vunpack.c.l.b16 %v724
  %v1054 = vunpack.c.h.b16 %v724
  %v1055 = vunpack.c.l.b16 %v725
  %v1056 = vunpack.c.h.b16 %v725
  %v1057 = vunpack.c.l.b16 %v726
  %v1058 = vunpack.c.h.b16 %v726
  %v1059 = vunpack.c.l.b16 %v727
  %v1060 = vunpack.c.h.b16 %v727
  %v1061 = vunpack.c.l.b16 %v728
  %v1062 = vunpack.c.h.b16 %v728
  %v1063 = vunpack.c.l.b16 %v729
  %v1064 = vunpack.c.h.b16 %v729
  %v1065 = vunpack.c.l.b16 %v730
  %v1066 = vunpack.c.h.b16 %v730
  %v1067 = vunpack.c.l.b16 %v731
  %v1068 = vunpack.c.h.b16 %v731
  %v1069 = vunpack.c.l.b16 %v732
  %v1070 = vunpack.c.h.b16 %v732
  %v1071 = vunpack.c.l.b16 %v733
  %v1072 = vunpack.c.h.b16 %v733
  %v1073 = vunpack.c.l.b16 %v734
  %v1074 = vunpack.c.h.b16 %v734
  %v1075 = vunpack.c.l.b16 %v735
  %v1076 = vunpack.c.h.b16 %v735
  %v1077 = vunpack.c.l.b16 %v736
  %v1078 = vunpack.c.h.b16 %v736
  %v1079 = vunpack.c.l.b16 %v737
  %v1080 = vunpack.c.h.b16 %v737
  %v1081 = vunpack.c.l.b16 %v738
  %v1082 = vunpack.c.h.b16 %v738
  %v1083 = vunpack.c.l.b16 %v739
  %v1084 = vunpack.c.h.b16 %v739
  %v1085 = vunpack.c.l.b16 %v740
  %v1086 = vunpack.c.h.b16 %v740
  %v1087 = vunpack.c.l.b16 %v741
  %v1088 = vunpack.c.h.b16 %v741
  %v1089 = vunpack.c.l.b16 %v742
  %v1090 = vunpack.c.h.b16 %v742
  %v1091 = vunpack.c.l.b16 %v743
  %v1092 = vunpack.c.h.b16 %v743
  %v1093 = vunpack.c.l.b16 %v744
  %v1094 = vunpack.c.h.b16 %v744
  %v1095 = vunpack.c.l.b16 %v745
  %v1096 = vunpack.c.h.b16 %v745
  %v1097 = vunpack.c.l.b16 %v746
  %v1098 = vunpack.c.h.b16 %v746
  %v1099 = vunpack.c.l.b16 %v747
  %v1100 = vunpack.c.h.b16 %v747
  %v1101 = vunpack.c.l.b16 %v748
  %v1102 = vunpack.c.h.b16 %v748
  %v1103 = vunpack.c.l.b16 %v749
  %v1104 = vunpack.c.h.b16 %v749
  %v1105 = vunpack.c.l.b16 %v750
  %v1106 = vunpack.c.h.b16 %v750
  %v1107 = vunpack.c.l.b16 %v751
  %v1108 = vunpack.c.h.b16 %v751
  %v1109 = vunpack.c.l.b16 %v752
  %v1110 = vunpack.c.h.b16 %v752
  %v1111 = vunpack.c.l.b16 %v753
  %v1112 = vunpack.c.h.b16 %v753
  %v1113 = vunpack.c.l.b16 %v754
  %v1114 = vunpack.c.h.b16 %v754
  %v1115 = vunpack.c.l.b16 %v755
  %v1116 = vunpack.c.h.b16 %v755
  %v1117 = vunpack.c.l.b16 %v756
  %v1118 = vunpack.c.h.b16 %v756
  %v1119 = vunpack.c.l.b16 %v757
  %v1120 = vunpack.c.h.b16 %v757
  %v1121 = vunpack.c.l.b16 %v758
  %v1122 = vunpack.c.h.b16 %v758
  %v1123 = vunpack.c.l.b16 %v759
  %v1124 = vunpack.c.h.b16 %v759
  %v1125 = vunpack.c.l.b16 %v760
  %v1126 = vunpack.c.h.b16 %v760
  %v1127 = vunpack.c.l.b16 %v761
  %v1128 = vunpack.c.h.b16 %v761
  %v1129 = vunpack.c.l.b16 %v762
  %v1130 = vunpack.c.h.b16 %v762
  %v1131 = vunpack.c.l.b16 %v763
  %v1132 = vunpack.c.h.b16 %v763
  %v1133 = vunpack.c.l.b16 %v764
  %v1134 = vunpack.c.h.b16 %v764
  %v1135 = vunpack.c.l.b16 %v765
  %v1136 = vunpack.c.h.b16 %v765
  %v1137 = vunpack.c.l.b16 %v766
  %v1138 = vunpack.c.h.b16 %v766
  %v1139 = vunpack.c.l.b16 %v767
  %v1140 = vunpack.c.h.b16 %v767
  %v1141 = vunpack.c.l.b16 %v768
  %v1142 = vunpack.c.h.b16 %v768
  %v1143 = vunpack.c.l.b16 %v769
  %v1144 = vunpack.c.h.b16 %v769
  %v1145 = vunpack.c.l.b16 %v770
  %v1146 = vunpack.c.h.b16 %v770
  %v1147 = vunpack.c.l.b16 %v771
  %v1148 = vunpack.c.h.b16 %v771
  %v1149 = vunpack.c.l.b16 %v772
  %v1150 = vunpack.c.h.b16 %v772
  %v1151 = vunpack.c.l.b16 %v773
  %v1152 = vunpack.c.h.b16 %v773
  %v1153 = vunpack.c.l.b16 %v774
  %v1154 = vunpack.c.h.b16 %v774
  %v1155 = vunpack.c.l.b16 %v775
  %v1156 = vunpack.c.h.b16 %v775
  %v1157 = vunpack.c.l.b16 %v776
  %v1158 = vunpack.c.h.b16 %v776
  %v1159 = vunpack.c.l.b16 %v777
  %v1160 = vunpack.c.h.b16 %v777
  %v1161 = vunpack.c.l.b16 %v778
  %v1162 = vunpack.c.h.b16 %v778
  %v1163 = vpack.c.b16 %v915, %v907
  %v1164 = vpack.c.b16 %v916, %v908
  %v1165 = vpack.c.b16 %v917, %v909
  %v1166 = vpack.c.b16 %v918, %v910
  %v1167 = vpack.c.b16 %v919, %v911
  %v1168 = vpack.c.b16 %v920, %v912
  %v1169 = vpack.c.b16 %v921, %v913
  %v1170 = vpack.c.b16 %v922, %v914
  %v1171 = vpack.c.b16 %v931, %v923
  %v1172 = vpack.c.b16 %v932, %v924
  %v1173 = vpack.c.b16 %v933, %v925
  %v1174 = vpack.c.b16 %v934, %v926
  %v1175 = vpack.c.b16 %v935, %v927
  %v1176 = vpack.c.b16 %v936, %v928
  %v1177 = vpack.c.b16 %v937, %v929
  %v1178 = vpack.c.b16 %v938, %v930
  %v1179 = vpack.c.b16 %v947, %v939
  %v1180 = vpack.c.b16 %v948, %v940
  %v1181 = vpack.c.b16 %v949, %v941
  %v1182 = vpack.c.b16 %v950, %v942
  %v1183 = vpack.c.b16 %v951, %v943
  %v1184 = vpack.c.b16 %v952, %v944
  %v1185 = vpack.c.b16 %v953, %v945
  %v1186 = vpack.c.b16 %v954, %v946
  %v1187 = vpack.c.b16 %v963, %v955
  %v1188 = vpack.c.b16 %v964, %v956
  %v1189 = vpack.c.b16 %v965, %v957
  %v1190 = vpack.c.b16 %v966, %v958
  %v1191 = vpack.c.b16 %v967, %v959
  %v1192 = vpack.c.b16 %v968, %v960
  %v1193 = vpack.c.b16 %v969, %v961
  %v1194 = vpack.c.b16 %v970, %v962
  %v1195 = vpack.c.b16 %v979, %v971
  %v1196 = vpack.c.b16 %v980, %v972
  %v1197 = vpack.c.b16 %v981, %v973
  %v1198 = vpack.c.b16 %v982, %v974
  %v1199 = vpack.c.b16 %v983, %v975
  %v1200 = vpack.c.b16 %v984, %v976
  %v1201 = vpack.c.b16 %v985, %v977
  %v1202 = vpack.c.b16 %v986, %v978
  %v1203 = vpack.c.b16 %v995, %v987
  %v1204 = vpack.c.b16 %v996, %v988
  %v1205 = vpack.c.b16 %v997, %v989
  %v1206 = vpack.c.b16 %v998, %v990
  %v1207 = vpack.c.b16 %v999, %v991
  %v1208 = vpack.c.b16 %v1000, %v992
  %v1209 = vpack.c.b16 %v1001, %v993
  %v1210 = vpack.c.b16 %v1002, %v994
  %v1211 = vpack.c.b16 %v1011, %v1003
  %v1212 = vpack.c.b16 %v1012, %v1004
  %v1213 = vpack.c.b16 %v1013, %v1005
  %v1214 = vpack.c.b16 %v1014, %v1006
  %v1215 = vpack.c.b16 %v1015, %v1007
  %v1216 = vpack.c.b16 %v1016, %v1008
  %v1217 = vpack.c.b16 %v1017, %v1009
  %v1218 = vpack.c.b16 %v1018, %v1010
  %v1219 = vpack.c.b16 %v1027, %v1019
  %v1220 = vpack.c.b16 %v1028, %v1020
  %v1221 = vpack.c.b16 %v1029, %v1021
  %v1222 = vpack.c.b16 %v1030, %v1022
  %v1223 = vpack.c.b16 %v1031, %v1023
  %v1224 = vpack.c.b16 %v1032, %v1024
  %v1225 = vpack.c.b16 %v1033, %v1025
  %v1226 = vpack.c.b16 %v1034, %v1026
  %v1227 = vpack.c.b16 %v1043, %v1035
  %v1228 = vpack.c.b16 %v1044, %v1036
  %v1229 = vpack.c.b16 %v1045, %v1037
  %v1230 = vpack.c.b16 %v1046, %v1038
  %v1231 = vpack.c.b16 %v1047, %v1039
  %v1232 = vpack.c.b16 %v1048, %v1040
  %v1233 = vpack.c.b16 %v1049, %v1041
  %v1234 = vpack.c.b16 %v1050, %v1042
  %v1235 = vpack.c.b16 %v1059, %v1051
  %v1236 = vpack.c.b16 %v1060, %v1052
  %v1237 = vpack.c.b16 %v1061, %v1053
  %v1238 = vpack.c.b16 %v1062, %v1054
  %v1239 = vpack.c.b16 %v1063, %v1055
  %v1240 = vpack.c.b16 %v1064, %v1056
  %v1241 = vpack.c.b16 %v1065, %v1057
  %v1242 = vpack.c.b16 %v1066, %v1058
  %v1243 = vpack.c.b16 %v1075, %v1067
  %v1244 = vpack.c.b16 %v1076, %v1068
  %v1245 = vpack.c.b16 %v1077, %v1069
  %v1246 = vpack.c.b16 %v1078, %v1070
  %v1247 = vpack.c.b16 %v1079, %v1071
  %v1248 = vpack.c.b16 %v1080, %v1072
  %v1249 = vpack.c.b16 %v1081, %v1073
  %v1250 = vpack.c.b16 %v1082, %v1074
  %v1251 = vpack.c.b16 %v1091, %v1083
  %v1252 = vpack.c.b16 %v1092, %v1084
  %v1253 = vpack.c.b16 %v1093, %v1085
  %v1254 = vpack.c.b16 %v1094, %v1086
  %v1255 = vpack.c.b16 %v1095, %v1087
  %v1256 = vpack.c.b16 %v1096, %v1088
  %v1257 = vpack.c.b16 %v1097, %v1089
  %v1258 = vpack.c.b16 %v1098, %v1090
  %v1259 = vpack.c.b16 %v1107, %v1099
  %v1260 = vpack.c.b16 %v1108, %v1100
  %v1261 = vpack.c.b16 %v1109, %v1101
  %v1262 = vpack.c.b16 %v1110, %v1102
  %v1263 = vpack.c.b16 %v1111, %v1103
  %v1264 = vpack.c.b16 %v1112, %v1104
  %v1265 = vpack.c.b16 %v1113, %v1105
  %v1266 = vpack.c.b16 %v1114, %v1106
  %v1267 = vpack.c.b16 %v1123, %v1115
  %v1268 = vpack.c.b16 %v1124, %v1116
  %v1269 = vpack.c.b16 %v1125, %v1117
  %v1270 = vpack.c.b16 %v1126, %v1118
  %v1271 = vpack.c.b16 %v1127, %v1119
  %v1272 = vpack.c.b16 %v1128, %v1120
  %v1273 = vpack.c.b16 %v1129, %v1121
  %v1274 = vpack.c.b16 %v1130, %v1122
  %v1275 = vpack.c.b16 %v1139, %v1131
  %v1276 = vpack.c.b16 %v1140, %v1132
  %v1277 = vpack.c.b16 %v1141, %v1133
  %v1278 = vpack.c.b16 %v1142, %v1134
  %v1279 = vpack.c.b16 %v1143, %v1135
  %v1280 = vpack.c.b16 %v1144, %v1136
  %v1281 = vpack.c.b16 %v1145, %v1137
  %v1282 = vpack.c.b16 %v1146, %v1138
  %v1283 = vpack.c.b16 %v1155, %v1147
  %v1284 = vpack.c.b16 %v1156, %v1148
  %v1285 = vpack.c.b16 %v1157, %v1149
  %v1286 = vpack.c.b16 %v1158, %v1150
  %v1287 = vpack.c.b16 %v1159, %v1151
  %v1288 = vpack.c.b16 %v1160, %v1152
  %v1289 = vpack.c.b16 %v1161, %v1153
  %v1290 = vpack.c.b16 %v1162, %v1154
  %1419 = vmatprep.subr.bf16.mxu0 %v524
  %1420 = vmatpush1.bf16.msra.mxu0 %v523
  %1421 = vmatprep.subr.bf16.mxu0 %v526
  %1422 = vmatpush1.bf16.msra.mxu0 %v525
  %1423 = vmatprep.subr.bf16.mxu0 %v528
  %1424 = vmatpush1.bf16.msra.mxu0 %v527
  %1425 = vmatprep.subr.bf16.mxu0 %v530
  %1426 = vmatpush1.bf16.msra.mxu0 %v529
  %1427 = vmatprep.subr.bf16.mxu0 %v532
  %1428 = vmatpush1.bf16.msra.mxu0 %v531
  %1429 = vmatprep.subr.bf16.mxu0 %v534
  %1430 = vmatpush1.bf16.msra.mxu0 %v533
  %1431 = vmatprep.subr.bf16.mxu0 %v536
  %1432 = vmatpush1.bf16.msra.mxu0 %v535
  %1433 = vmatprep.subr.bf16.mxu0 %v538
  %1434 = vmatpush1.bf16.msra.mxu0 %v537
  %1435 = vmatprep.subr.bf16.mxu0 %v540
  %1436 = vmatpush1.bf16.msra.mxu0 %v539
  %1437 = vmatprep.subr.bf16.mxu0 %v542
  %1438 = vmatpush1.bf16.msra.mxu0 %v541
  %1439 = vmatprep.subr.bf16.mxu0 %v544
  %1440 = vmatpush1.bf16.msra.mxu0 %v543
  %1441 = vmatprep.subr.bf16.mxu0 %v546
  %1442 = vmatpush1.bf16.msra.mxu0 %v545
  %1443 = vmatprep.subr.bf16.mxu0 %v548
  %1444 = vmatpush1.bf16.msra.mxu0 %v547
  %1445 = vmatprep.subr.bf16.mxu0 %v550
  %1446 = vmatpush1.bf16.msra.mxu0 %v549
  %1447 = vmatprep.subr.bf16.mxu0 %v552
  %1448 = vmatpush1.bf16.msra.mxu0 %v551
  %1449 = vmatprep.subr.bf16.mxu0 %v554
  %1450 = vmatpush1.bf16.msra.mxu0 %v553
  %1451 = vmatprep.mubr.bf16.mxu0 %v1164
  %1452 = vmatmul.mubr.bf16.gmra.mrb[0].mxu0 %v1163
  %v1453 = vpop.f32.mrb[0].mxu0
  %v1454 = vadd.f32 0.0, %v1453
  %v1455 = vpop.f32.mrb[0].mxu0
  %v1456 = vadd.f32 0.0, %v1455
  %v1457 = vpop.f32.mrb[0].mxu0
  %v1458 = vadd.f32 0.0, %v1457
  %v1459 = vpop.f32.mrb[0].mxu0
  %v1460 = vadd.f32 0.0, %v1459
  %1461 = vmatprep.mubr.bf16.mxu0 %v1172
  %1462 = vmatmul.mubr.bf16.gmra.mrb[0].mxu0 %v1171
  %v1463 = vpop.f32.mrb[0].mxu0
  %v1464 = vadd.f32 0.0, %v1463
  %v1465 = vpop.f32.mrb[0].mxu0
  %v1466 = vadd.f32 0.0, %v1465
  %v1467 = vpop.f32.mrb[0].mxu0
  %v1468 = vadd.f32 0.0, %v1467
  %v1469 = vpop.f32.mrb[0].mxu0
  %v1470 = vadd.f32 0.0, %v1469
  %1471 = vmatprep.mubr.bf16.mxu0 %v1180
  %1472 = vmatmul.mubr.bf16.gmra.mrb[0].mxu0 %v1179
  %v1473 = vpop.f32.mrb[0].mxu0
  %v1474 = vadd.f32 0.0, %v1473
  %v1475 = vpop.f32.mrb[0].mxu0
  %v1476 = vadd.f32 0.0, %v1475
  %v1477 = vpop.f32.mrb[0].mxu0
  %v1478 = vadd.f32 0.0, %v1477
  %v1479 = vpop.f32.mrb[0].mxu0
  %v1480 = vadd.f32 0.0, %v1479
  %1481 = vmatprep.mubr.bf16.mxu0 %v1188
  %1482 = vmatmul.mubr.bf16.gmra.mrb[0].mxu0 %v1187
  %v1483 = vpop.f32.mrb[0].mxu0
  %v1484 = vadd.f32 0.0, %v1483
  %v1485 = vpop.f32.mrb[0].mxu0
  %v1486 = vadd.f32 0.0, %v1485
  %v1487 = vpop.f32.mrb[0].mxu0
  %v1488 = vadd.f32 0.0, %v1487
  %v1489 = vpop.f32.mrb[0].mxu0
  %v1490 = vadd.f32 0.0, %v1489
  %1491 = vmatprep.mubr.bf16.mxu0 %v1196
  %1492 = vmatmul.mubr.bf16.gmra.mrb[0].mxu0 %v1195
  %v1493 = vpop.f32.mrb[0].mxu0
  %v1494 = vadd.f32 0.0, %v1493
  %v1495 = vpop.f32.mrb[0].mxu0
  %v1496 = vadd.f32 0.0, %v1495
  %v1497 = vpop.f32.mrb[0].mxu0
  %v1498 = vadd.f32 0.0, %v1497
  %v1499 = vpop.f32.mrb[0].mxu0
  %v1500 = vadd.f32 0.0, %v1499
  %1501 = vmatprep.mubr.bf16.mxu0 %v1204
  %1502 = vmatmul.mubr.bf16.gmra.mrb[0].mxu0 %v1203
  %v1503 = vpop.f32.mrb[0].mxu0
  %v1504 = vadd.f32 0.0, %v1503
  %v1505 = vpop.f32.mrb[0].mxu0
  %v1506 = vadd.f32 0.0, %v1505
  %v1507 = vpop.f32.mrb[0].mxu0
  %v1508 = vadd.f32 0.0, %v1507
  %v1509 = vpop.f32.mrb[0].mxu0
  %v1510 = vadd.f32 0.0, %v1509
  %1511 = vmatprep.mubr.bf16.mxu0 %v1212
  %1512 = vmatmul.mubr.bf16.gmra.mrb[0].mxu0 %v1211
  %v1513 = vpop.f32.mrb[0].mxu0
  %v1514 = vadd.f32 0.0, %v1513
  %v1515 = vpop.f32.mrb[0].mxu0
  %v1516 = vadd.f32 0.0, %v1515
  %v1517 = vpop.f32.mrb[0].mxu0
  %v1518 = vadd.f32 0.0, %v1517
  %v1519 = vpop.f32.mrb[0].mxu0
  %v1520 = vadd.f32 0.0, %v1519
  %1521 = vmatprep.mubr.bf16.mxu0 %v1220
  %1522 = vmatmul.mubr.bf16.gmra.mrb[0].mxu0 %v1219
  %v1523 = vpop.f32.mrb[0].mxu0
  %v1524 = vadd.f32 0.0, %v1523
  %v1525 = vpop.f32.mrb[0].mxu0
  %v1526 = vadd.f32 0.0, %v1525
  %v1527 = vpop.f32.mrb[0].mxu0
  %v1528 = vadd.f32 0.0, %v1527
  %v1529 = vpop.f32.mrb[0].mxu0
  %v1530 = vadd.f32 0.0, %v1529
  %1531 = vmatprep.mubr.bf16.mxu0 %v1228
  %1532 = vmatmul.mubr.bf16.gmra.mrb[0].mxu0 %v1227
  %v1533 = vpop.f32.mrb[0].mxu0
  %v1534 = vadd.f32 0.0, %v1533
  %v1535 = vpop.f32.mrb[0].mxu0
  %v1536 = vadd.f32 0.0, %v1535
  %v1537 = vpop.f32.mrb[0].mxu0
  %v1538 = vadd.f32 0.0, %v1537
  %v1539 = vpop.f32.mrb[0].mxu0
  %v1540 = vadd.f32 0.0, %v1539
  %1541 = vmatprep.mubr.bf16.mxu0 %v1236
  %1542 = vmatmul.mubr.bf16.gmra.mrb[0].mxu0 %v1235
  %v1543 = vpop.f32.mrb[0].mxu0
  %v1544 = vadd.f32 0.0, %v1543
  %v1545 = vpop.f32.mrb[0].mxu0
  %v1546 = vadd.f32 0.0, %v1545
  %v1547 = vpop.f32.mrb[0].mxu0
  %v1548 = vadd.f32 0.0, %v1547
  %v1549 = vpop.f32.mrb[0].mxu0
  %v1550 = vadd.f32 0.0, %v1549
  %1551 = vmatprep.mubr.bf16.mxu0 %v1244
  %1552 = vmatmul.mubr.bf16.gmra.mrb[0].mxu0 %v1243
  %v1553 = vpop.f32.mrb[0].mxu0
  %v1554 = vadd.f32 0.0, %v1553
  %v1555 = vpop.f32.mrb[0].mxu0
  %v1556 = vadd.f32 0.0, %v1555
  %v1557 = vpop.f32.mrb[0].mxu0
  %v1558 = vadd.f32 0.0, %v1557
  %v1559 = vpop.f32.mrb[0].mxu0
  %v1560 = vadd.f32 0.0, %v1559
  %1561 = vmatprep.mubr.bf16.mxu0 %v1252
  %1562 = vmatmul.mubr.bf16.gmra.mrb[0].mxu0 %v1251
  %v1563 = vpop.f32.mrb[0].mxu0
  %v1564 = vadd.f32 0.0, %v1563
  %v1565 = vpop.f32.mrb[0].mxu0
  %v1566 = vadd.f32 0.0, %v1565
  %v1567 = vpop.f32.mrb[0].mxu0
  %v1568 = vadd.f32 0.0, %v1567
  %v1569 = vpop.f32.mrb[0].mxu0
  %v1570 = vadd.f32 0.0, %v1569
  %1571 = vmatprep.mubr.bf16.mxu0 %v1260
  %1572 = vmatmul.mubr.bf16.gmra.mrb[0].mxu0 %v1259
  %v1573 = vpop.f32.mrb[0].mxu0
  %v1574 = vadd.f32 0.0, %v1573
  %v1575 = vpop.f32.mrb[0].mxu0
  %v1576 = vadd.f32 0.0, %v1575
  %v1577 = vpop.f32.mrb[0].mxu0
  %v1578 = vadd.f32 0.0, %v1577
  %v1579 = vpop.f32.mrb[0].mxu0
  %v1580 = vadd.f32 0.0, %v1579
  %1581 = vmatprep.mubr.bf16.mxu0 %v1268
  %1582 = vmatmul.mubr.bf16.gmra.mrb[0].mxu0 %v1267
  %v1583 = vpop.f32.mrb[0].mxu0
  %v1584 = vadd.f32 0.0, %v1583
  %v1585 = vpop.f32.mrb[0].mxu0
  %v1586 = vadd.f32 0.0, %v1585
  %v1587 = vpop.f32.mrb[0].mxu0
  %v1588 = vadd.f32 0.0, %v1587
  %v1589 = vpop.f32.mrb[0].mxu0
  %v1590 = vadd.f32 0.0, %v1589
  %1591 = vmatprep.mubr.bf16.mxu0 %v1276
  %1592 = vmatmul.mubr.bf16.gmra.mrb[0].mxu0 %v1275
  %v1593 = vpop.f32.mrb[0].mxu0
  %v1594 = vadd.f32 0.0, %v1593
  %v1595 = vpop.f32.mrb[0].mxu0
  %v1596 = vadd.f32 0.0, %v1595
  %v1597 = vpop.f32.mrb[0].mxu0
  %v1598 = vadd.f32 0.0, %v1597
  %v1599 = vpop.f32.mrb[0].mxu0
  %v1600 = vadd.f32 0.0, %v1599
  %1601 = vmatprep.mubr.bf16.mxu0 %v1284
  %1602 = vmatmul.mubr.bf16.gmra.mrb[0].mxu0 %v1283
  %v1603 = vpop.f32.mrb[0].mxu0
  %v1604 = vadd.f32 0.0, %v1603
  %v1605 = vpop.f32.mrb[0].mxu0
  %v1606 = vadd.f32 0.0, %v1605
  %v1607 = vpop.f32.mrb[0].mxu0
  %v1608 = vadd.f32 0.0, %v1607
  %v1609 = vpop.f32.mrb[0].mxu0
  %v1610 = vadd.f32 0.0, %v1609
  %1611 = vdwg.mxu0
  %1612 = vmatprep.subr.bf16.mxu0 %v556
  %1613 = vmatpush1.bf16.msra.mxu0 %v555
  %1614 = vmatprep.subr.bf16.mxu0 %v558
  %1615 = vmatpush1.bf16.msra.mxu0 %v557
  %1616 = vmatprep.subr.bf16.mxu0 %v560
  %1617 = vmatpush1.bf16.msra.mxu0 %v559
  %1618 = vmatprep.subr.bf16.mxu0 %v562
  %1619 = vmatpush1.bf16.msra.mxu0 %v561
  %1620 = vmatprep.subr.bf16.mxu0 %v564
  %1621 = vmatpush1.bf16.msra.mxu0 %v563
  %1622 = vmatprep.subr.bf16.mxu0 %v566
  %1623 = vmatpush1.bf16.msra.mxu0 %v565
  %1624 = vmatprep.subr.bf16.mxu0 %v568
  %1625 = vmatpush1.bf16.msra.mxu0 %v567
  %1626 = vmatprep.subr.bf16.mxu0 %v570
  %1627 = vmatpush1.bf16.msra.mxu0 %v569
  %1628 = vmatprep.subr.bf16.mxu0 %v572
  %1629 = vmatpush1.bf16.msra.mxu0 %v571
  %1630 = vmatprep.subr.bf16.mxu0 %v574
  %1631 = vmatpush1.bf16.msra.mxu0 %v573
  %1632 = vmatprep.subr.bf16.mxu0 %v576
  %1633 = vmatpush1.bf16.msra.mxu0 %v575
  %1634 = vmatprep.subr.bf16.mxu0 %v578
  %1635 = vmatpush1.bf16.msra.mxu0 %v577
  %1636 = vmatprep.subr.bf16.mxu0 %v580
  %1637 = vmatpush1.bf16.msra.mxu0 %v579
  %1638 = vmatprep.subr.bf16.mxu0 %v582
  %1639 = vmatpush1.bf16.msra.mxu0 %v581
  %1640 = vmatprep.subr.bf16.mxu0 %v584
  %1641 = vmatpush1.bf16.msra.mxu0 %v583
  %1642 = vmatprep.subr.bf16.mxu0 %v586
  %1643 = vmatpush1.bf16.msra.mxu0 %v585
  %1644 = vmatprep.mubr.bf16.mxu0 %v1166
  %1645 = vmatmul.mubr.bf16.gmra.mrb[0].mxu0 %v1165
  %v1646 = vpop.f32.mrb[0].mxu0
  %v1647 = vadd.f32 %v1454, %v1646
  %v1648 = vpop.f32.mrb[0].mxu0
  %v1649 = vadd.f32 %v1456, %v1648
  %v1650 = vpop.f32.mrb[0].mxu0
  %v1651 = vadd.f32 %v1458, %v1650
  %v1652 = vpop.f32.mrb[0].mxu0
  %v1653 = vadd.f32 %v1460, %v1652
  %1654 = vmatprep.mubr.bf16.mxu0 %v1174
  %1655 = vmatmul.mubr.bf16.gmra.mrb[0].mxu0 %v1173
  %v1656 = vpop.f32.mrb[0].mxu0
  %v1657 = vadd.f32 %v1464, %v1656
  %v1658 = vpop.f32.mrb[0].mxu0
  %v1659 = vadd.f32 %v1466, %v1658
  %v1660 = vpop.f32.mrb[0].mxu0
  %v1661 = vadd.f32 %v1468, %v1660
  %v1662 = vpop.f32.mrb[0].mxu0
  %v1663 = vadd.f32 %v1470, %v1662
  %1664 = vmatprep.mubr.bf16.mxu0 %v1182
  %1665 = vmatmul.mubr.bf16.gmra.mrb[0].mxu0 %v1181
  %v1666 = vpop.f32.mrb[0].mxu0
  %v1667 = vadd.f32 %v1474, %v1666
  %v1668 = vpop.f32.mrb[0].mxu0
  %v1669 = vadd.f32 %v1476, %v1668
  %v1670 = vpop.f32.mrb[0].mxu0
  %v1671 = vadd.f32 %v1478, %v1670
  %v1672 = vpop.f32.mrb[0].mxu0
  %v1673 = vadd.f32 %v1480, %v1672
  %1674 = vmatprep.mubr.bf16.mxu0 %v1190
  %1675 = vmatmul.mubr.bf16.gmra.mrb[0].mxu0 %v1189
  %v1676 = vpop.f32.mrb[0].mxu0
  %v1677 = vadd.f32 %v1484, %v1676
  %v1678 = vpop.f32.mrb[0].mxu0
  %v1679 = vadd.f32 %v1486, %v1678
  %v1680 = vpop.f32.mrb[0].mxu0
  %v1681 = vadd.f32 %v1488, %v1680
  %v1682 = vpop.f32.mrb[0].mxu0
  %v1683 = vadd.f32 %v1490, %v1682
  %1684 = vmatprep.mubr.bf16.mxu0 %v1198
  %1685 = vmatmul.mubr.bf16.gmra.mrb[0].mxu0 %v1197
  %v1686 = vpop.f32.mrb[0].mxu0
  %v1687 = vadd.f32 %v1494, %v1686
  %v1688 = vpop.f32.mrb[0].mxu0
  %v1689 = vadd.f32 %v1496, %v1688
  %v1690 = vpop.f32.mrb[0].mxu0
  %v1691 = vadd.f32 %v1498, %v1690
  %v1692 = vpop.f32.mrb[0].mxu0
  %v1693 = vadd.f32 %v1500, %v1692
  %1694 = vmatprep.mubr.bf16.mxu0 %v1206
  %1695 = vmatmul.mubr.bf16.gmra.mrb[0].mxu0 %v1205
  %v1696 = vpop.f32.mrb[0].mxu0
  %v1697 = vadd.f32 %v1504, %v1696
  %v1698 = vpop.f32.mrb[0].mxu0
  %v1699 = vadd.f32 %v1506, %v1698
  %v1700 = vpop.f32.mrb[0].mxu0
  %v1701 = vadd.f32 %v1508, %v1700
  %v1702 = vpop.f32.mrb[0].mxu0
  %v1703 = vadd.f32 %v1510, %v1702
  %1704 = vmatprep.mubr.bf16.mxu0 %v1214
  %1705 = vmatmul.mubr.bf16.gmra.mrb[0].mxu0 %v1213
  %v1706 = vpop.f32.mrb[0].mxu0
  %v1707 = vadd.f32 %v1514, %v1706
  %v1708 = vpop.f32.mrb[0].mxu0
  %v1709 = vadd.f32 %v1516, %v1708
  %v1710 = vpop.f32.mrb[0].mxu0
  %v1711 = vadd.f32 %v1518, %v1710
  %v1712 = vpop.f32.mrb[0].mxu0
  %v1713 = vadd.f32 %v1520, %v1712
  %1714 = vmatprep.mubr.bf16.mxu0 %v1222
  %1715 = vmatmul.mubr.bf16.gmra.mrb[0].mxu0 %v1221
  %v1716 = vpop.f32.mrb[0].mxu0
  %v1717 = vadd.f32 %v1524, %v1716
  %v1718 = vpop.f32.mrb[0].mxu0
  %v1719 = vadd.f32 %v1526, %v1718
  %v1720 = vpop.f32.mrb[0].mxu0
  %v1721 = vadd.f32 %v1528, %v1720
  %v1722 = vpop.f32.mrb[0].mxu0
  %v1723 = vadd.f32 %v1530, %v1722
  %1724 = vmatprep.mubr.bf16.mxu0 %v1230
  %1725 = vmatmul.mubr.bf16.gmra.mrb[0].mxu0 %v1229
  %v1726 = vpop.f32.mrb[0].mxu0
  %v1727 = vadd.f32 %v1534, %v1726
  %v1728 = vpop.f32.mrb[0].mxu0
  %v1729 = vadd.f32 %v1536, %v1728
  %v1730 = vpop.f32.mrb[0].mxu0
  %v1731 = vadd.f32 %v1538, %v1730
  %v1732 = vpop.f32.mrb[0].mxu0
  %v1733 = vadd.f32 %v1540, %v1732
  %1734 = vmatprep.mubr.bf16.mxu0 %v1238
  %1735 = vmatmul.mubr.bf16.gmra.mrb[0].mxu0 %v1237
  %v1736 = vpop.f32.mrb[0].mxu0
  %v1737 = vadd.f32 %v1544, %v1736
  %v1738 = vpop.f32.mrb[0].mxu0
  %v1739 = vadd.f32 %v1546, %v1738
  %v1740 = vpop.f32.mrb[0].mxu0
  %v1741 = vadd.f32 %v1548, %v1740
  %v1742 = vpop.f32.mrb[0].mxu0
  %v1743 = vadd.f32 %v1550, %v1742
  %1744 = vmatprep.mubr.bf16.mxu0 %v1246
  %1745 = vmatmul.mubr.bf16.gmra.mrb[0].mxu0 %v1245
  %v1746 = vpop.f32.mrb[0].mxu0
  %v1747 = vadd.f32 %v1554, %v1746
  %v1748 = vpop.f32.mrb[0].mxu0
  %v1749 = vadd.f32 %v1556, %v1748
  %v1750 = vpop.f32.mrb[0].mxu0
  %v1751 = vadd.f32 %v1558, %v1750
  %v1752 = vpop.f32.mrb[0].mxu0
  %v1753 = vadd.f32 %v1560, %v1752
  %1754 = vmatprep.mubr.bf16.mxu0 %v1254
  %1755 = vmatmul.mubr.bf16.gmra.mrb[0].mxu0 %v1253
  %v1756 = vpop.f32.mrb[0].mxu0
  %v1757 = vadd.f32 %v1564, %v1756
  %v1758 = vpop.f32.mrb[0].mxu0
  %v1759 = vadd.f32 %v1566, %v1758
  %v1760 = vpop.f32.mrb[0].mxu0
  %v1761 = vadd.f32 %v1568, %v1760
  %v1762 = vpop.f32.mrb[0].mxu0
  %v1763 = vadd.f32 %v1570, %v1762
  %1764 = vmatprep.mubr.bf16.mxu0 %v1262
  %1765 = vmatmul.mubr.bf16.gmra.mrb[0].mxu0 %v1261
  %v1766 = vpop.f32.mrb[0].mxu0
  %v1767 = vadd.f32 %v1574, %v1766
  %v1768 = vpop.f32.mrb[0].mxu0
  %v1769 = vadd.f32 %v1576, %v1768
  %v1770 = vpop.f32.mrb[0].mxu0
  %v1771 = vadd.f32 %v1578, %v1770
  %v1772 = vpop.f32.mrb[0].mxu0
  %v1773 = vadd.f32 %v1580, %v1772
  %1774 = vmatprep.mubr.bf16.mxu0 %v1270
  %1775 = vmatmul.mubr.bf16.gmra.mrb[0].mxu0 %v1269
  %v1776 = vpop.f32.mrb[0].mxu0
  %v1777 = vadd.f32 %v1584, %v1776
  %v1778 = vpop.f32.mrb[0].mxu0
  %v1779 = vadd.f32 %v1586, %v1778
  %v1780 = vpop.f32.mrb[0].mxu0
  %v1781 = vadd.f32 %v1588, %v1780
  %v1782 = vpop.f32.mrb[0].mxu0
  %v1783 = vadd.f32 %v1590, %v1782
  %1784 = vmatprep.mubr.bf16.mxu0 %v1278
  %1785 = vmatmul.mubr.bf16.gmra.mrb[0].mxu0 %v1277
  %v1786 = vpop.f32.mrb[0].mxu0
  %v1787 = vadd.f32 %v1594, %v1786
  %v1788 = vpop.f32.mrb[0].mxu0
  %v1789 = vadd.f32 %v1596, %v1788
  %v1790 = vpop.f32.mrb[0].mxu0
  %v1791 = vadd.f32 %v1598, %v1790
  %v1792 = vpop.f32.mrb[0].mxu0
  %v1793 = vadd.f32 %v1600, %v1792
  %1794 = vmatprep.mubr.bf16.mxu0 %v1286
  %1795 = vmatmul.mubr.bf16.gmra.mrb[0].mxu0 %v1285
  %v1796 = vpop.f32.mrb[0].mxu0
  %v1797 = vadd.f32 %v1604, %v1796
  %v1798 = vpop.f32.mrb[0].mxu0
  %v1799 = vadd.f32 %v1606, %v1798
  %v1800 = vpop.f32.mrb[0].mxu0
  %v1801 = vadd.f32 %v1608, %v1800
  %v1802 = vpop.f32.mrb[0].mxu0
  %v1803 = vadd.f32 %v1610, %v1802
  %1804 = vdwg.mxu0
  %1805 = vmatprep.subr.bf16.mxu0 %v588
  %1806 = vmatpush1.bf16.msra.mxu0 %v587
  %1807 = vmatprep.subr.bf16.mxu0 %v590
  %1808 = vmatpush1.bf16.msra.mxu0 %v589
  %1809 = vmatprep.subr.bf16.mxu0 %v592
  %1810 = vmatpush1.bf16.msra.mxu0 %v591
  %1811 = vmatprep.subr.bf16.mxu0 %v594
  %1812 = vmatpush1.bf16.msra.mxu0 %v593
  %1813 = vmatprep.subr.bf16.mxu0 %v596
  %1814 = vmatpush1.bf16.msra.mxu0 %v595
  %1815 = vmatprep.subr.bf16.mxu0 %v598
  %1816 = vmatpush1.bf16.msra.mxu0 %v597
  %1817 = vmatprep.subr.bf16.mxu0 %v600
  %1818 = vmatpush1.bf16.msra.mxu0 %v599
  %1819 = vmatprep.subr.bf16.mxu0 %v602
  %1820 = vmatpush1.bf16.msra.mxu0 %v601
  %1821 = vmatprep.subr.bf16.mxu0 %v604
  %1822 = vmatpush1.bf16.msra.mxu0 %v603
  %1823 = vmatprep.subr.bf16.mxu0 %v606
  %1824 = vmatpush1.bf16.msra.mxu0 %v605
  %1825 = vmatprep.subr.bf16.mxu0 %v608
  %1826 = vmatpush1.bf16.msra.mxu0 %v607
  %1827 = vmatprep.subr.bf16.mxu0 %v610
  %1828 = vmatpush1.bf16.msra.mxu0 %v609
  %1829 = vmatprep.subr.bf16.mxu0 %v612
  %1830 = vmatpush1.bf16.msra.mxu0 %v611
  %1831 = vmatprep.subr.bf16.mxu0 %v614
  %1832 = vmatpush1.bf16.msra.mxu0 %v613
  %1833 = vmatprep.subr.bf16.mxu0 %v616
  %1834 = vmatpush1.bf16.msra.mxu0 %v615
  %1835 = vmatprep.subr.bf16.mxu0 %v618
  %1836 = vmatpush1.bf16.msra.mxu0 %v617
  %1837 = vmatprep.mubr.bf16.mxu0 %v1168
  %1838 = vmatmul.mubr.bf16.gmra.mrb[0].mxu0 %v1167
  %v1839 = vpop.f32.mrb[0].mxu0
  %v1840 = vadd.f32 %v1647, %v1839
  %v1841 = vpop.f32.mrb[0].mxu0
  %v1842 = vadd.f32 %v1649, %v1841
  %v1843 = vpop.f32.mrb[0].mxu0
  %v1844 = vadd.f32 %v1651, %v1843
  %v1845 = vpop.f32.mrb[0].mxu0
  %v1846 = vadd.f32 %v1653, %v1845
  %1847 = vmatprep.mubr.bf16.mxu0 %v1176
  %1848 = vmatmul.mubr.bf16.gmra.mrb[0].mxu0 %v1175
  %v1849 = vpop.f32.mrb[0].mxu0
  %v1850 = vadd.f32 %v1657, %v1849
  %v1851 = vpop.f32.mrb[0].mxu0
  %v1852 = vadd.f32 %v1659, %v1851
  %v1853 = vpop.f32.mrb[0].mxu0
  %v1854 = vadd.f32 %v1661, %v1853
  %v1855 = vpop.f32.mrb[0].mxu0
  %v1856 = vadd.f32 %v1663, %v1855
  %1857 = vmatprep.mubr.bf16.mxu0 %v1184
  %1858 = vmatmul.mubr.bf16.gmra.mrb[0].mxu0 %v1183
  %v1859 = vpop.f32.mrb[0].mxu0
  %v1860 = vadd.f32 %v1667, %v1859
  %v1861 = vpop.f32.mrb[0].mxu0
  %v1862 = vadd.f32 %v1669, %v1861
  %v1863 = vpop.f32.mrb[0].mxu0
  %v1864 = vadd.f32 %v1671, %v1863
  %v1865 = vpop.f32.mrb[0].mxu0
  %v1866 = vadd.f32 %v1673, %v1865
  %1867 = vmatprep.mubr.bf16.mxu0 %v1192
  %1868 = vmatmul.mubr.bf16.gmra.mrb[0].mxu0 %v1191
  %v1869 = vpop.f32.mrb[0].mxu0
  %v1870 = vadd.f32 %v1677, %v1869
  %v1871 = vpop.f32.mrb[0].mxu0
  %v1872 = vadd.f32 %v1679, %v1871
  %v1873 = vpop.f32.mrb[0].mxu0
  %v1874 = vadd.f32 %v1681, %v1873
  %v1875 = vpop.f32.mrb[0].mxu0
  %v1876 = vadd.f32 %v1683, %v1875
  %1877 = vmatprep.mubr.bf16.mxu0 %v1200
  %1878 = vmatmul.mubr.bf16.gmra.mrb[0].mxu0 %v1199
  %v1879 = vpop.f32.mrb[0].mxu0
  %v1880 = vadd.f32 %v1687, %v1879
  %v1881 = vpop.f32.mrb[0].mxu0
  %v1882 = vadd.f32 %v1689, %v1881
  %v1883 = vpop.f32.mrb[0].mxu0
  %v1884 = vadd.f32 %v1691, %v1883
  %v1885 = vpop.f32.mrb[0].mxu0
  %v1886 = vadd.f32 %v1693, %v1885
  %1887 = vmatprep.mubr.bf16.mxu0 %v1208
  %1888 = vmatmul.mubr.bf16.gmra.mrb[0].mxu0 %v1207
  %v1889 = vpop.f32.mrb[0].mxu0
  %v1890 = vadd.f32 %v1697, %v1889
  %v1891 = vpop.f32.mrb[0].mxu0
  %v1892 = vadd.f32 %v1699, %v1891
  %v1893 = vpop.f32.mrb[0].mxu0
  %v1894 = vadd.f32 %v1701, %v1893
  %v1895 = vpop.f32.mrb[0].mxu0
  %v1896 = vadd.f32 %v1703, %v1895
  %1897 = vmatprep.mubr.bf16.mxu0 %v1216
  %1898 = vmatmul.mubr.bf16.gmra.mrb[0].mxu0 %v1215
  %v1899 = vpop.f32.mrb[0].mxu0
  %v1900 = vadd.f32 %v1707, %v1899
  %v1901 = vpop.f32.mrb[0].mxu0
  %v1902 = vadd.f32 %v1709, %v1901
  %v1903 = vpop.f32.mrb[0].mxu0
  %v1904 = vadd.f32 %v1711, %v1903
  %v1905 = vpop.f32.mrb[0].mxu0
  %v1906 = vadd.f32 %v1713, %v1905
  %1907 = vmatprep.mubr.bf16.mxu0 %v1224
  %1908 = vmatmul.mubr.bf16.gmra.mrb[0].mxu0 %v1223
  %v1909 = vpop.f32.mrb[0].mxu0
  %v1910 = vadd.f32 %v1717, %v1909
  %v1911 = vpop.f32.mrb[0].mxu0
  %v1912 = vadd.f32 %v1719, %v1911
  %v1913 = vpop.f32.mrb[0].mxu0
  %v1914 = vadd.f32 %v1721, %v1913
  %v1915 = vpop.f32.mrb[0].mxu0
  %v1916 = vadd.f32 %v1723, %v1915
  %1917 = vmatprep.mubr.bf16.mxu0 %v1232
  %1918 = vmatmul.mubr.bf16.gmra.mrb[0].mxu0 %v1231
  %v1919 = vpop.f32.mrb[0].mxu0
  %v1920 = vadd.f32 %v1727, %v1919
  %v1921 = vpop.f32.mrb[0].mxu0
  %v1922 = vadd.f32 %v1729, %v1921
  %v1923 = vpop.f32.mrb[0].mxu0
  %v1924 = vadd.f32 %v1731, %v1923
  %v1925 = vpop.f32.mrb[0].mxu0
  %v1926 = vadd.f32 %v1733, %v1925
  %1927 = vmatprep.mubr.bf16.mxu0 %v1240
  %1928 = vmatmul.mubr.bf16.gmra.mrb[0].mxu0 %v1239
  %v1929 = vpop.f32.mrb[0].mxu0
  %v1930 = vadd.f32 %v1737, %v1929
  %v1931 = vpop.f32.mrb[0].mxu0
  %v1932 = vadd.f32 %v1739, %v1931
  %v1933 = vpop.f32.mrb[0].mxu0
  %v1934 = vadd.f32 %v1741, %v1933
  %v1935 = vpop.f32.mrb[0].mxu0
  %v1936 = vadd.f32 %v1743, %v1935
  %1937 = vmatprep.mubr.bf16.mxu0 %v1248
  %1938 = vmatmul.mubr.bf16.gmra.mrb[0].mxu0 %v1247
  %v1939 = vpop.f32.mrb[0].mxu0
  %v1940 = vadd.f32 %v1747, %v1939
  %v1941 = vpop.f32.mrb[0].mxu0
  %v1942 = vadd.f32 %v1749, %v1941
  %v1943 = vpop.f32.mrb[0].mxu0
  %v1944 = vadd.f32 %v1751, %v1943
  %v1945 = vpop.f32.mrb[0].mxu0
  %v1946 = vadd.f32 %v1753, %v1945
  %1947 = vmatprep.mubr.bf16.mxu0 %v1256
  %1948 = vmatmul.mubr.bf16.gmra.mrb[0].mxu0 %v1255
  %v1949 = vpop.f32.mrb[0].mxu0
  %v1950 = vadd.f32 %v1757, %v1949
  %v1951 = vpop.f32.mrb[0].mxu0
  %v1952 = vadd.f32 %v1759, %v1951
  %v1953 = vpop.f32.mrb[0].mxu0
  %v1954 = vadd.f32 %v1761, %v1953
  %v1955 = vpop.f32.mrb[0].mxu0
  %v1956 = vadd.f32 %v1763, %v1955
  %1957 = vmatprep.mubr.bf16.mxu0 %v1264
  %1958 = vmatmul.mubr.bf16.gmra.mrb[0].mxu0 %v1263
  %v1959 = vpop.f32.mrb[0].mxu0
  %v1960 = vadd.f32 %v1767, %v1959
  %v1961 = vpop.f32.mrb[0].mxu0
  %v1962 = vadd.f32 %v1769, %v1961
  %v1963 = vpop.f32.mrb[0].mxu0
  %v1964 = vadd.f32 %v1771, %v1963
  %v1965 = vpop.f32.mrb[0].mxu0
  %v1966 = vadd.f32 %v1773, %v1965
  %1967 = vmatprep.mubr.bf16.mxu0 %v1272
  %1968 = vmatmul.mubr.bf16.gmra.mrb[0].mxu0 %v1271
  %v1969 = vpop.f32.mrb[0].mxu0
  %v1970 = vadd.f32 %v1777, %v1969
  %v1971 = vpop.f32.mrb[0].mxu0
  %v1972 = vadd.f32 %v1779, %v1971
  %v1973 = vpop.f32.mrb[0].mxu0
  %v1974 = vadd.f32 %v1781, %v1973
  %v1975 = vpop.f32.mrb[0].mxu0
  %v1976 = vadd.f32 %v1783, %v1975
  %1977 = vmatprep.mubr.bf16.mxu0 %v1280
  %1978 = vmatmul.mubr.bf16.gmra.mrb[0].mxu0 %v1279
  %v1979 = vpop.f32.mrb[0].mxu0
  %v1980 = vadd.f32 %v1787, %v1979
  %v1981 = vpop.f32.mrb[0].mxu0
  %v1982 = vadd.f32 %v1789, %v1981
  %v1983 = vpop.f32.mrb[0].mxu0
  %v1984 = vadd.f32 %v1791, %v1983
  %v1985 = vpop.f32.mrb[0].mxu0
  %v1986 = vadd.f32 %v1793, %v1985
  %1987 = vmatprep.mubr.bf16.mxu0 %v1288
  %1988 = vmatmul.mubr.bf16.gmra.mrb[0].mxu0 %v1287
  %v1989 = vpop.f32.mrb[0].mxu0
  %v1990 = vadd.f32 %v1797, %v1989
  %v1991 = vpop.f32.mrb[0].mxu0
  %v1992 = vadd.f32 %v1799, %v1991
  %v1993 = vpop.f32.mrb[0].mxu0
  %v1994 = vadd.f32 %v1801, %v1993
  %v1995 = vpop.f32.mrb[0].mxu0
  %v1996 = vadd.f32 %v1803, %v1995
  %1997 = vdwg.mxu0
  %1998 = vmatprep.subr.bf16.mxu0 %v620
  %1999 = vmatpush1.bf16.msra.mxu0 %v619
  %2000 = vmatprep.subr.bf16.mxu0 %v622
  %2001 = vmatpush1.bf16.msra.mxu0 %v621
  %2002 = vmatprep.subr.bf16.mxu0 %v624
  %2003 = vmatpush1.bf16.msra.mxu0 %v623
  %2004 = vmatprep.subr.bf16.mxu0 %v626
  %2005 = vmatpush1.bf16.msra.mxu0 %v625
  %2006 = vmatprep.subr.bf16.mxu0 %v628
  %2007 = vmatpush1.bf16.msra.mxu0 %v627
  %2008 = vmatprep.subr.bf16.mxu0 %v630
  %2009 = vmatpush1.bf16.msra.mxu0 %v629
  %2010 = vmatprep.subr.bf16.mxu0 %v632
  %2011 = vmatpush1.bf16.msra.mxu0 %v631
  %2012 = vmatprep.subr.bf16.mxu0 %v634
  %2013 = vmatpush1.bf16.msra.mxu0 %v633
  %2014 = vmatprep.subr.bf16.mxu0 %v636
  %2015 = vmatpush1.bf16.msra.mxu0 %v635
  %2016 = vmatprep.subr.bf16.mxu0 %v638
  %2017 = vmatpush1.bf16.msra.mxu0 %v637
  %2018 = vmatprep.subr.bf16.mxu0 %v640
  %2019 = vmatpush1.bf16.msra.mxu0 %v639
  %2020 = vmatprep.subr.bf16.mxu0 %v642
  %2021 = vmatpush1.bf16.msra.mxu0 %v641
  %2022 = vmatprep.subr.bf16.mxu0 %v644
  %2023 = vmatpush1.bf16.msra.mxu0 %v643
  %2024 = vmatprep.subr.bf16.mxu0 %v646
  %2025 = vmatpush1.bf16.msra.mxu0 %v645
  %2026 = vmatprep.subr.bf16.mxu0 %v648
  %2027 = vmatpush1.bf16.msra.mxu0 %v647
  %2028 = vmatprep.subr.bf16.mxu0 %v650
  %2029 = vmatpush1.bf16.msra.mxu0 %v649
  %2030 = vmatprep.mubr.bf16.mxu0 %v1170
  %2031 = vmatmul.mubr.bf16.gmra.mrb[0].mxu0 %v1169
  %v2032 = vpop.f32.mrb[0].mxu0
  %v2033 = vadd.f32 %v1840, %v2032
  %v2034 = vpop.f32.mrb[0].mxu0
  %v2035 = vadd.f32 %v1842, %v2034
  %v2036 = vpop.f32.mrb[0].mxu0
  %v2037 = vadd.f32 %v1844, %v2036
  %v2038 = vpop.f32.mrb[0].mxu0
  %v2039 = vadd.f32 %v1846, %v2038
  %2040 = vmatprep.mubr.bf16.mxu0 %v1178
  %2041 = vmatmul.mubr.bf16.gmra.mrb[0].mxu0 %v1177
  %v2042 = vpop.f32.mrb[0].mxu0
  %v2043 = vadd.f32 %v1850, %v2042
  %v2044 = vpop.f32.mrb[0].mxu0
  %v2045 = vadd.f32 %v1852, %v2044
  %v2046 = vpop.f32.mrb[0].mxu0
  %v2047 = vadd.f32 %v1854, %v2046
  %v2048 = vpop.f32.mrb[0].mxu0
  %v2049 = vadd.f32 %v1856, %v2048
  %2050 = vmatprep.mubr.bf16.mxu0 %v1186
  %2051 = vmatmul.mubr.bf16.gmra.mrb[0].mxu0 %v1185
  %v2052 = vpop.f32.mrb[0].mxu0
  %v2053 = vadd.f32 %v1860, %v2052
  %v2054 = vpop.f32.mrb[0].mxu0
  %v2055 = vadd.f32 %v1862, %v2054
  %v2056 = vpop.f32.mrb[0].mxu0
  %v2057 = vadd.f32 %v1864, %v2056
  %v2058 = vpop.f32.mrb[0].mxu0
  %v2059 = vadd.f32 %v1866, %v2058
  %2060 = vmatprep.mubr.bf16.mxu0 %v1194
  %2061 = vmatmul.mubr.bf16.gmra.mrb[0].mxu0 %v1193
  %v2062 = vpop.f32.mrb[0].mxu0
  %v2063 = vadd.f32 %v1870, %v2062
  %v2064 = vpop.f32.mrb[0].mxu0
  %v2065 = vadd.f32 %v1872, %v2064
  %v2066 = vpop.f32.mrb[0].mxu0
  %v2067 = vadd.f32 %v1874, %v2066
  %v2068 = vpop.f32.mrb[0].mxu0
  %v2069 = vadd.f32 %v1876, %v2068
  %2070 = vmatprep.mubr.bf16.mxu0 %v1202
  %2071 = vmatmul.mubr.bf16.gmra.mrb[0].mxu0 %v1201
  %v2072 = vpop.f32.mrb[0].mxu0
  %v2073 = vadd.f32 %v1880, %v2072
  %v2074 = vpop.f32.mrb[0].mxu0
  %v2075 = vadd.f32 %v1882, %v2074
  %v2076 = vpop.f32.mrb[0].mxu0
  %v2077 = vadd.f32 %v1884, %v2076
  %v2078 = vpop.f32.mrb[0].mxu0
  %v2079 = vadd.f32 %v1886, %v2078
  %2080 = vmatprep.mubr.bf16.mxu0 %v1210
  %2081 = vmatmul.mubr.bf16.gmra.mrb[0].mxu0 %v1209
  %v2082 = vpop.f32.mrb[0].mxu0
  %v2083 = vadd.f32 %v1890, %v2082
  %v2084 = vpop.f32.mrb[0].mxu0
  %v2085 = vadd.f32 %v1892, %v2084
  %v2086 = vpop.f32.mrb[0].mxu0
  %v2087 = vadd.f32 %v1894, %v2086
  %v2088 = vpop.f32.mrb[0].mxu0
  %v2089 = vadd.f32 %v1896, %v2088
  %2090 = vmatprep.mubr.bf16.mxu0 %v1218
  %2091 = vmatmul.mubr.bf16.gmra.mrb[0].mxu0 %v1217
  %v2092 = vpop.f32.mrb[0].mxu0
  %v2093 = vadd.f32 %v1900, %v2092
  %v2094 = vpop.f32.mrb[0].mxu0
  %v2095 = vadd.f32 %v1902, %v2094
  %v2096 = vpop.f32.mrb[0].mxu0
  %v2097 = vadd.f32 %v1904, %v2096
  %v2098 = vpop.f32.mrb[0].mxu0
  %v2099 = vadd.f32 %v1906, %v2098
  %2100 = vmatprep.mubr.bf16.mxu0 %v1226
  %2101 = vmatmul.mubr.bf16.gmra.mrb[0].mxu0 %v1225
  %v2102 = vpop.f32.mrb[0].mxu0
  %v2103 = vadd.f32 %v1910, %v2102
  %v2104 = vpop.f32.mrb[0].mxu0
  %v2105 = vadd.f32 %v1912, %v2104
  %v2106 = vpop.f32.mrb[0].mxu0
  %v2107 = vadd.f32 %v1914, %v2106
  %v2108 = vpop.f32.mrb[0].mxu0
  %v2109 = vadd.f32 %v1916, %v2108
  %2110 = vmatprep.mubr.bf16.mxu0 %v1234
  %2111 = vmatmul.mubr.bf16.gmra.mrb[0].mxu0 %v1233
  %v2112 = vpop.f32.mrb[0].mxu0
  %v2113 = vadd.f32 %v1920, %v2112
  %v2114 = vpop.f32.mrb[0].mxu0
  %v2115 = vadd.f32 %v1922, %v2114
  %v2116 = vpop.f32.mrb[0].mxu0
  %v2117 = vadd.f32 %v1924, %v2116
  %v2118 = vpop.f32.mrb[0].mxu0
  %v2119 = vadd.f32 %v1926, %v2118
  %2120 = vmatprep.mubr.bf16.mxu0 %v1242
  %2121 = vmatmul.mubr.bf16.gmra.mrb[0].mxu0 %v1241
  %v2122 = vpop.f32.mrb[0].mxu0
  %v2123 = vadd.f32 %v1930, %v2122
  %v2124 = vpop.f32.mrb[0].mxu0
  %v2125 = vadd.f32 %v1932, %v2124
  %v2126 = vpop.f32.mrb[0].mxu0
  %v2127 = vadd.f32 %v1934, %v2126
  %v2128 = vpop.f32.mrb[0].mxu0
  %v2129 = vadd.f32 %v1936, %v2128
  %2130 = vmatprep.mubr.bf16.mxu0 %v1250
  %2131 = vmatmul.mubr.bf16.gmra.mrb[0].mxu0 %v1249
  %v2132 = vpop.f32.mrb[0].mxu0
  %v2133 = vadd.f32 %v1940, %v2132
  %v2134 = vpop.f32.mrb[0].mxu0
  %v2135 = vadd.f32 %v1942, %v2134
  %v2136 = vpop.f32.mrb[0].mxu0
  %v2137 = vadd.f32 %v1944, %v2136
  %v2138 = vpop.f32.mrb[0].mxu0
  %v2139 = vadd.f32 %v1946, %v2138
  %2140 = vmatprep.mubr.bf16.mxu0 %v1258
  %2141 = vmatmul.mubr.bf16.gmra.mrb[0].mxu0 %v1257
  %v2142 = vpop.f32.mrb[0].mxu0
  %v2143 = vadd.f32 %v1950, %v2142
  %v2144 = vpop.f32.mrb[0].mxu0
  %v2145 = vadd.f32 %v1952, %v2144
  %v2146 = vpop.f32.mrb[0].mxu0
  %v2147 = vadd.f32 %v1954, %v2146
  %v2148 = vpop.f32.mrb[0].mxu0
  %v2149 = vadd.f32 %v1956, %v2148
  %2150 = vmatprep.mubr.bf16.mxu0 %v1266
  %2151 = vmatmul.mubr.bf16.gmra.mrb[0].mxu0 %v1265
  %v2152 = vpop.f32.mrb[0].mxu0
  %v2153 = vadd.f32 %v1960, %v2152
  %v2154 = vpop.f32.mrb[0].mxu0
  %v2155 = vadd.f32 %v1962, %v2154
  %v2156 = vpop.f32.mrb[0].mxu0
  %v2157 = vadd.f32 %v1964, %v2156
  %v2158 = vpop.f32.mrb[0].mxu0
  %v2159 = vadd.f32 %v1966, %v2158
  %2160 = vmatprep.mubr.bf16.mxu0 %v1274
  %2161 = vmatmul.mubr.bf16.gmra.mrb[0].mxu0 %v1273
  %v2162 = vpop.f32.mrb[0].mxu0
  %v2163 = vadd.f32 %v1970, %v2162
  %v2164 = vpop.f32.mrb[0].mxu0
  %v2165 = vadd.f32 %v1972, %v2164
  %v2166 = vpop.f32.mrb[0].mxu0
  %v2167 = vadd.f32 %v1974, %v2166
  %v2168 = vpop.f32.mrb[0].mxu0
  %v2169 = vadd.f32 %v1976, %v2168
  %2170 = vmatprep.mubr.bf16.mxu0 %v1282
  %2171 = vmatmul.mubr.bf16.gmra.mrb[0].mxu0 %v1281
  %v2172 = vpop.f32.mrb[0].mxu0
  %v2173 = vadd.f32 %v1980, %v2172
  %v2174 = vpop.f32.mrb[0].mxu0
  %v2175 = vadd.f32 %v1982, %v2174
  %v2176 = vpop.f32.mrb[0].mxu0
  %v2177 = vadd.f32 %v1984, %v2176
  %v2178 = vpop.f32.mrb[0].mxu0
  %v2179 = vadd.f32 %v1986, %v2178
  %2180 = vmatprep.mubr.bf16.mxu0 %v1290
  %2181 = vmatmul.mubr.bf16.gmra.mrb[0].mxu0 %v1289
  %v2182 = vpop.f32.mrb[0].mxu0
  %v2183 = vadd.f32 %v1990, %v2182
  %v2184 = vpop.f32.mrb[0].mxu0
  %v2185 = vadd.f32 %v1992, %v2184
  %v2186 = vpop.f32.mrb[0].mxu0
  %v2187 = vadd.f32 %v1994, %v2186
  %v2188 = vpop.f32.mrb[0].mxu0
  %v2189 = vadd.f32 %v1996, %v2188
  %2190 = vdwg.mxu0
  %2191 = vst [vmem:[%s2] sm:$0xff] %v2033
  %2192 = vst [vmem:[%s2 + $0x8] sm:$0xff] %v2035
  %2193 = vst [vmem:[%s2 + $0x10] sm:$0xff] %v2037
  %2194 = vst [vmem:[%s2 + $0x18] sm:$0xff] %v2039
  %2195 = vst [vmem:[%s2 + $0x20] sm:$0xff] %v2043
  %2196 = vst [vmem:[%s2 + $0x28] sm:$0xff] %v2045
  %2197 = vst [vmem:[%s2 + $0x30] sm:$0xff] %v2047
  %2198 = vst [vmem:[%s2 + $0x38] sm:$0xff] %v2049
  %2199 = vst [vmem:[%s2 + $0x40] sm:$0xff] %v2053
  %2200 = vst [vmem:[%s2 + $0x48] sm:$0xff] %v2055
  %2201 = vst [vmem:[%s2 + $0x50] sm:$0xff] %v2057
  %2202 = vst [vmem:[%s2 + $0x58] sm:$0xff] %v2059
  %2203 = vst [vmem:[%s2 + $0x60] sm:$0xff] %v2063
  %2204 = vst [vmem:[%s2 + $0x68] sm:$0xff] %v2065
  %2205 = vst [vmem:[%s2 + $0x70] sm:$0xff] %v2067
  %2206 = vst [vmem:[%s2 + $0x78] sm:$0xff] %v2069
  %2207 = vst [vmem:[%s2 + $0x80] sm:$0xff] %v2073
  %2208 = vst [vmem:[%s2 + $0x88] sm:$0xff] %v2075
  %2209 = vst [vmem:[%s2 + $0x90] sm:$0xff] %v2077
  %2210 = vst [vmem:[%s2 + $0x98] sm:$0xff] %v2079
  %2211 = vst [vmem:[%s2 + $0xa0] sm:$0xff] %v2083
  %2212 = vst [vmem:[%s2 + $0xa8] sm:$0xff] %v2085
  %2213 = vst [vmem:[%s2 + $0xb0] sm:$0xff] %v2087
  %2214 = vst [vmem:[%s2 + $0xb8] sm:$0xff] %v2089
  %2215 = vst [vmem:[%s2 + $0xc0] sm:$0xff] %v2093
  %2216 = vst [vmem:[%s2 + $0xc8] sm:$0xff] %v2095
  %2217 = vst [vmem:[%s2 + $0xd0] sm:$0xff] %v2097
  %2218 = vst [vmem:[%s2 + $0xd8] sm:$0xff] %v2099
  %2219 = vst [vmem:[%s2 + $0xe0] sm:$0xff] %v2103
  %2220 = vst [vmem:[%s2 + $0xe8] sm:$0xff] %v2105
  %2221 = vst [vmem:[%s2 + $0xf0] sm:$0xff] %v2107
  %2222 = vst [vmem:[%s2 + $0xf8] sm:$0xff] %v2109
  %2223 = vst [vmem:[%s2 + $0x100] sm:$0xff] %v2113
  %2224 = vst [vmem:[%s2 + $0x108] sm:$0xff] %v2115
  %2225 = vst [vmem:[%s2 + $0x110] sm:$0xff] %v2117
  %2226 = vst [vmem:[%s2 + $0x118] sm:$0xff] %v2119
  %2227 = vst [vmem:[%s2 + $0x120] sm:$0xff] %v2123
  %2228 = vst [vmem:[%s2 + $0x128] sm:$0xff] %v2125
  %2229 = vst [vmem:[%s2 + $0x130] sm:$0xff] %v2127
  %2230 = vst [vmem:[%s2 + $0x138] sm:$0xff] %v2129
  %2231 = vst [vmem:[%s2 + $0x140] sm:$0xff] %v2133
  %2232 = vst [vmem:[%s2 + $0x148] sm:$0xff] %v2135
  %2233 = vst [vmem:[%s2 + $0x150] sm:$0xff] %v2137
  %2234 = vst [vmem:[%s2 + $0x158] sm:$0xff] %v2139
  %2235 = vst [vmem:[%s2 + $0x160] sm:$0xff] %v2143
  %2236 = vst [vmem:[%s2 + $0x168] sm:$0xff] %v2145
  %2237 = vst [vmem:[%s2 + $0x170] sm:$0xff] %v2147
  %2238 = vst [vmem:[%s2 + $0x178] sm:$0xff] %v2149
  %2239 = vst [vmem:[%s2 + $0x180] sm:$0xff] %v2153
  %2240 = vst [vmem:[%s2 + $0x188] sm:$0xff] %v2155
  %2241 = vst [vmem:[%s2 + $0x190] sm:$0xff] %v2157
  %2242 = vst [vmem:[%s2 + $0x198] sm:$0xff] %v2159
  %2243 = vst [vmem:[%s2 + $0x1a0] sm:$0xff] %v2163
  %2244 = vst [vmem:[%s2 + $0x1a8] sm:$0xff] %v2165
  %2245 = vst [vmem:[%s2 + $0x1b0] sm:$0xff] %v2167
  %2246 = vst [vmem:[%s2 + $0x1b8] sm:$0xff] %v2169
  %2247 = vst [vmem:[%s2 + $0x1c0] sm:$0xff] %v2173
  %2248 = vst [vmem:[%s2 + $0x1c8] sm:$0xff] %v2175
  %2249 = vst [vmem:[%s2 + $0x1d0] sm:$0xff] %v2177
  %2250 = vst [vmem:[%s2 + $0x1d8] sm:$0xff] %v2179
  %2251 = vst [vmem:[%s2 + $0x1e0] sm:$0xff] %v2183
  %2252 = vst [vmem:[%s2 + $0x1e8] sm:$0xff] %v2185
  %2253 = vst [vmem:[%s2 + $0x1f0] sm:$0xff] %v2187
  %2254 = vst [vmem:[%s2 + $0x1f8] sm:$0xff] %v2189
  // Predicated region
  $region10: #{tpu_custom_call.1} parent=0 // pred_check
    _
  $region11: #{tpu_custom_call.1} parent=0 // pred_check_branch
    %2256 = sbr.rel (0) target = $region13
  $region12: #{tpu_custom_call.1} parent=0 // pred_region
    _
  $region13: #{tpu_custom_call.1} parent=0 // pred_fallthru
    _
  // Predicated region
  $region14: #{tpu_custom_call.1} parent=0 // pred_check
    _
  $region15: #{tpu_custom_call.1} parent=0 // pred_check_branch
    %2258 = sbr.rel (0) target = $region17
  $region16: #{tpu_custom_call.1} parent=0 // pred_region
    _
  $region17: #{tpu_custom_call.1} parent=0 // pred_fallthru
    _

</llo_original>
